<compile_context>
chip_gen: v5e
topology: v5e:2x2
jax: 0.10.0
libtpu: 0.0.40
codegen_flags: <defaults>
</compile_context>

<pallas_src>
import jax
import jax.numpy as jnp
from jax.experimental import pallas as pl


# ----------------------------- in-kernel helpers -----------------------------

def _layernorm(x, w, b):
    # torch.nn.LayerNorm: biased variance, eps=1e-5
    mu = jnp.mean(x, axis=-1, keepdims=True)
    var = jnp.mean((x - mu) ** 2, axis=-1, keepdims=True)
    return (x - mu) * jax.lax.rsqrt(var + 1e-5) * w + b


def _erf(x):
    # Abramowitz & Stegun 7.1.26, |error| < 1.5e-7 — uses only exp / FMA / where,
    # which are guaranteed Mosaic lowerings (no reliance on an erf primitive).
    a1, a2, a3, a4, a5 = (0.254829592, -0.284496736, 1.421413741,
                          -1.453152027, 1.061405429)
    p = 0.3275911
    ax = jnp.abs(x)
    t = 1.0 / (1.0 + p * ax)
    poly = t * (a1 + t * (a2 + t * (a3 + t * (a4 + t * a5))))
    e = 1.0 - poly * jnp.exp(-ax * ax)
    return jnp.where(x >= 0, e, -e)


def _gelu_exact(x):
    # torch.nn.GELU() default (exact, erf-based)
    return 0.5 * x * (1.0 + _erf(x * 0.7071067811865476))


# ------------------------------- fused kernel --------------------------------

def _make_fused_kernel(head_counts, dim_head, n_tokens, batch, rtatt, scale_a):
    depth = len(head_counts)
    scale = dim_head ** -0.5
    n_w = 4 * depth                      # per layer: w_qkv, w_out, w1, w2
    bn = batch * n_tokens

    def kernel(x_ref, vec_ref, b1_ref, *refs):
        w_refs = refs[:n_w]
        o_ref = refs[n_w]
        res_ref = refs[n_w + 1] if rtatt else None

        # fold batch into the token (sublane) axis: all per-token matmuls become
        # one wide 2-D matmul over B*N rows (N==8 so this reshape is layout-free).
        x = x_ref[...].reshape(bn, -1).astype(jnp.float32)        # (B*N, D)

        for li in range(depth):                                   # static unroll
            wqkv_ref, wout_ref, w1_ref, w2_ref = w_refs[4 * li: 4 * li + 4]
            heads = head_counts[li]
            inner = heads * dim_head
            is_last = li == depth - 1

            base = 6 * li
            aln_w = vec_ref[base + 0:base + 1, :]
            aln_b = vec_ref[base + 1:base + 2, :]
            b_out = vec_ref[base + 2:base + 3, :]
            fln_w = vec_ref[base + 3:base + 4, :]
            fln_b = vec_ref[base + 4:base + 5, :]
            b2 = vec_ref[base + 5:base + 6, :]
            b1 = b1_ref[li:li + 1, :]

            # ---- pre-norm multi-head attention + residual ----
            xn = _layernorm(x, aln_w, aln_b)                      # (B*N, D) f32
            # fused QKV: one (B*N, D) @ (D, 3*inner) bf16 matmul, f32 accumulation
            qkv = jnp.dot(xn.astype(jnp.bfloat16), wqkv_ref[...],
                          preferred_element_type=jnp.float32)     # (B*N, 3*inner)

            ov_heads = []
            for hi in range(heads):                               # static unroll
                lo = hi * dim_head
                q = qkv[:, lo:lo + dim_head].reshape(batch, n_tokens, dim_head)
                k = qkv[:, inner + lo:inner + lo + dim_head].reshape(
                    batch, n_tokens, dim_head)
                v = qkv[:, 2 * inner + lo:2 * inner + lo + dim_head].reshape(
                    batch, n_tokens, dim_head)
                # q @ k^T per batch element (single leading batch dim), bf16 -> f32
                dots = jax.lax.dot_general(
                    q.astype(jnp.bfloat16), k.astype(jnp.bfloat16),
                    (((2,), (2,)), ((0,), (0,))),
                    preferred_element_type=jnp.float32) * scale   # (B, N, N)
                if rtatt and is_last:
                    # eager writeback: keeps the (h, N, N) scores out of the live
                    # range across the final FFN.
                    res_ref[1 + hi] = dots.astype(res_ref.dtype)
                m = jnp.max(dots, axis=-1, keepdims=True)
                p = jnp.exp(dots - m)
                attn = p * pl.reciprocal(jnp.sum(p, axis=-1, keepdims=True),
                                         approx=True)
                ovh = jax.lax.dot_general(
                    attn.astype(jnp.bfloat16), v.astype(jnp.bfloat16),
                    (((2,), (1,)), ((0,), (0,))),
                    preferred_element_type=jnp.float32)           # (B, N, d)
                ov_heads.append(ovh.reshape(bn, dim_head))

            # single out-projection: concat(heads) (B*N, inner) @ (inner, D)
            ov = jnp.concatenate(ov_heads, axis=-1) if heads > 1 else ov_heads[0]
            out = jnp.dot(ov.astype(jnp.bfloat16), wout_ref[...],
                          preferred_element_type=jnp.float32) + b_out
            x = out + x

            # ---- pre-norm FFN + residual ----
            xn = _layernorm(x, fln_w, fln_b)
            h1 = jnp.dot(xn.astype(jnp.bfloat16), w1_ref[...],
                         preferred_element_type=jnp.float32) + b1
            h1 = _gelu_exact(h1)
            ff = jnp.dot(h1.astype(jnp.bfloat16), w2_ref[...],
                         preferred_element_type=jnp.float32) + b2
            x = ff + x

        o_ref[...] = x.reshape(batch, n_tokens, -1).astype(o_ref.dtype)
        if rtatt:
            xb = x.reshape(batch, n_tokens, -1)
            # aa kept f32: a single tiny matmul on a returned tensor; negligible cost.
            aa = jax.lax.dot_general(
                xb, xb, (((2,), (2,)), ((0,), (0,))),
                preferred_element_type=jnp.float32) * scale_a
            res_ref[0] = aa.astype(res_ref.dtype)

    return kernel


# --------------------------------- wrapper -----------------------------------

def transformer_forward(x, params, *, heads, dim_head, rtatt=False):
    B, N, D = x.shape
    depth = len(params)
    # NOTE: matches the PyTorch module — scalea intentionally uses the constructor
    # `heads`, not the last layer's head count.
    scalea = (heads * dim_head) ** -0.5

    head_counts = []
    vec_rows, b1_rows, w_inputs = [], [], []
    for attn_p, ff_p in params:
        three_inner = attn_p["w_qkv"].shape[1]
        assert three_inner % (3 * dim_head) == 0, "w_qkv width inconsistent with dim_head"
        h = three_inner // (3 * dim_head)
        inner = h * dim_head
        assert attn_p["w_qkv"].shape[0] == D
        assert attn_p["w_out"].shape == (inner, D)
        head_counts.append(h)
        # pack the tiny (1, D) vectors of this layer into one slab (fewer DMA
        # descriptors / padded VMEM buffers than 10+ scalar-ish inputs per layer).
        vec_rows += [attn_p["ln_w"].reshape(1, D), attn_p["ln_b"].reshape(1, D),
                     attn_p["b_out"].reshape(1, D),
                     ff_p["ln_w"].reshape(1, D), ff_p["ln_b"].reshape(1, D),
                     ff_p["b2"].reshape(1, D)]
        b1_rows.append(ff_p["b1"].reshape(1, -1))
        # weights go in as bf16 (MXU-native); accumulation stays f32 in-kernel.
        w_inputs += [attn_p["w_qkv"].astype(jnp.bfloat16),
                     attn_p["w_out"].astype(jnp.bfloat16),
                     ff_p["w1"].astype(jnp.bfloat16),
                     ff_p["w2"].astype(jnp.bfloat16)]

    vec_slab = jnp.concatenate(vec_rows, axis=0).astype(jnp.float32)   # (6*depth, D)
    b1_slab = jnp.concatenate(b1_rows, axis=0).astype(jnp.float32)     # (depth, mlp)

    last_heads = head_counts[-1]
    kernel = _make_fused_kernel(tuple(head_counts), dim_head, N, B, rtatt, scalea)

    if rtatt:
        # res stored head-major (1+h, B, N, N) so the kernel writes each slice with a
        # simple leading-index store; permuted to torch's (B, 1+h, N, N) in the wrapper.
        out_shape = (jax.ShapeDtypeStruct((B, N, D), x.dtype),
                     jax.ShapeDtypeStruct((1 + last_heads, B, N, N), jnp.float32))
    else:
        out_shape = jax.ShapeDtypeStruct((B, N, D), x.dtype)

    results = pl.pallas_call(kernel, out_shape=out_shape)(
        x, vec_slab, b1_slab, *w_inputs)

    if rtatt:
        out, res_raw = results
        return out, jnp.transpose(res_raw, (1, 0, 2, 3))
    return results


# ------------------------- pure-JAX reference (f32) --------------------------

def transformer_reference(x, params, *, heads, dim_head, rtatt=False):
    scalea = (heads * dim_head) ** -0.5
    scale = dim_head ** -0.5
    B, N, D = x.shape
    ra = None

    def ln(v, w, b):
        mu = v.mean(-1, keepdims=True)
        var = ((v - mu) ** 2).mean(-1, keepdims=True)
        return (v - mu) / jnp.sqrt(var + 1e-5) * w.reshape(-1) + b.reshape(-1)

    for attn_p, ff_p in params:
        h = attn_p["w_qkv"].shape[1] // (3 * dim_head)
        inner = h * dim_head
        xn = ln(x, attn_p["ln_w"], attn_p["ln_b"])
        qkv = xn @ attn_p["w_qkv"]
        q, k, v = jnp.split(qkv, 3, axis=-1)
        q, k, v = (t.reshape(B, N, h, dim_head).transpose(0, 2, 1, 3) for t in (q, k, v))
        dots = jnp.einsum("bhnd,bhmd->bhnm", q, k) * scale
        attn = jax.nn.softmax(dots, axis=-1)
        out = jnp.einsum("bhnm,bhmd->bhnd", attn, v)
        out = out.transpose(0, 2, 1, 3).reshape(B, N, inner)
        x = out @ attn_p["w_out"] + attn_p["b_out"].reshape(-1) + x
        ra = dots
        xn = ln(x, ff_p["ln_w"], ff_p["ln_b"])
        hdn = jax.nn.gelu(xn @ ff_p["w1"] + ff_p["b1"].reshape(-1), approximate=False)
        x = hdn @ ff_p["w2"] + ff_p["b2"].reshape(-1) + x
    if rtatt:
        aa = jnp.einsum("bnd,bmd->bnm", x, x) * scalea
        return x, jnp.concatenate([aa[:, None], ra], axis=1)
    return x


# ---------------------------------- params -----------------------------------

def init_params(key, dim, depth, heads, last_heads, dim_head, mlp_dim):
    params = []
    for layer_idx in range(depth):
        h = last_heads if layer_idx == depth - 1 else heads
        inner = h * dim_head
        ks = jax.random.split(jax.random.fold_in(key, layer_idx), 8)
        attn = dict(
            ln_w=1.0 + 0.1 * jax.random.normal(ks[0], (1, dim), jnp.float32),
            ln_b=0.05 * jax.random.normal(ks[1], (1, dim), jnp.float32),
            w_qkv=0.05 * jax.random.normal(ks[2], (dim, 3 * inner), jnp.float32),
            w_out=0.05 * jax.random.normal(ks[3], (inner, dim), jnp.float32),
            b_out=0.01 * jax.random.normal(ks[4], (1, dim), jnp.float32),
        )
        ff = dict(
            ln_w=1.0 + 0.1 * jax.random.normal(ks[5], (1, dim), jnp.float32),
            ln_b=jnp.zeros((1, dim), jnp.float32),
            w1=0.05 * jax.random.normal(ks[6], (dim, mlp_dim), jnp.float32),
            b1=jnp.zeros((1, mlp_dim), jnp.float32),
            w2=0.05 * jax.random.normal(ks[7], (mlp_dim, dim), jnp.float32),
            b2=jnp.zeros((1, dim), jnp.float32),
        )
        params.append((attn, ff))
    return params


if __name__ == "__main__":
    dim, depth, heads, last_heads, dim_head, mlp_dim = 32, 2, 4, 2, 16, 64
    B, N = 2, 8

    key = jax.random.PRNGKey(0)
    kx, kp = jax.random.split(key)
    x = jax.random.normal(kx, (B, N, dim), jnp.float32)
    params = init_params(kp, dim, depth, heads, last_heads, dim_head, mlp_dim)

    fwd = jax.jit(transformer_forward,
                  static_argnames=("heads", "dim_head", "rtatt"))

    # rtatt=False path (module default)
    out = jax.block_until_ready(fwd(x, params, heads=heads, dim_head=dim_head,
                                    rtatt=False))
    assert out.shape == (B, N, dim)

    # rtatt=True path: also emits (B, 1+last_heads, N, N)
    out2, res = jax.block_until_ready(fwd(x, params, heads=heads,
                                          dim_head=dim_head, rtatt=True))
    assert out2.shape == (B, N, dim)
    assert res.shape == (B, 1 + last_heads, N, N)

    # sanity vs pure-JAX reference (kernel uses bf16 MXU operands + approx reciprocal,
    # so tolerances are loose but comfortable at these magnitudes).
    ref_out, ref_res = transformer_reference(x, params, heads=heads,
                                             dim_head=dim_head, rtatt=True)
    assert jnp.allclose(out2, ref_out, atol=5e-2, rtol=5e-2), \
        float(jnp.max(jnp.abs(out2 - ref_out)))
    assert jnp.allclose(res, ref_res, atol=5e-2, rtol=5e-2), \
        float(jnp.max(jnp.abs(res - ref_res)))

    print("KERNEL_OK")
</pallas_src>

<mosaic_0001>
module attributes {stable_mosaic.version = 11 : i64} {
  func.func @kernel(%arg0: memref<2x8x32xf32, #tpu.memory_space<vmem>>, %arg1: memref<12x32xf32, #tpu.memory_space<vmem>>, %arg2: memref<2x64xf32, #tpu.memory_space<vmem>>, %arg3: memref<32x192xbf16, #tpu.memory_space<vmem>>, %arg4: memref<64x32xbf16, #tpu.memory_space<vmem>>, %arg5: memref<32x64xbf16, #tpu.memory_space<vmem>>, %arg6: memref<64x32xbf16, #tpu.memory_space<vmem>>, %arg7: memref<32x96xbf16, #tpu.memory_space<vmem>>, %arg8: memref<32x32xbf16, #tpu.memory_space<vmem>>, %arg9: memref<32x64xbf16, #tpu.memory_space<vmem>>, %arg10: memref<64x32xbf16, #tpu.memory_space<vmem>>, %arg11: memref<2x8x32xf32, #tpu.memory_space<vmem>>) attributes {dimension_semantics = [], scalar_prefetch = 0 : i64, scratch_operands = 0 : i64, tpu.core_type = #tpu.core_type<tc>} {
    %c0 = arith.constant 0 : index
    %c0_0 = arith.constant 0 : index
    %c0_1 = arith.constant 0 : index
    %0 = vector.load %arg0[%c0, %c0_0, %c0_1] : memref<2x8x32xf32, #tpu.memory_space<vmem>>, vector<2x8x32xf32>
    %1 = vector.shape_cast %0 : vector<2x8x32xf32> to vector<16x32xf32>
    %c0_2 = arith.constant 0 : index
    %c0_3 = arith.constant 0 : index
    %2 = vector.load %arg1[%c0_2, %c0_3] : memref<12x32xf32, #tpu.memory_space<vmem>>, vector<1x32xf32>
    %c1 = arith.constant 1 : index
    %c0_4 = arith.constant 0 : index
    %3 = vector.load %arg1[%c1, %c0_4] : memref<12x32xf32, #tpu.memory_space<vmem>>, vector<1x32xf32>
    %c2 = arith.constant 2 : index
    %c0_5 = arith.constant 0 : index
    %4 = vector.load %arg1[%c2, %c0_5] : memref<12x32xf32, #tpu.memory_space<vmem>>, vector<1x32xf32>
    %c3 = arith.constant 3 : index
    %c0_6 = arith.constant 0 : index
    %5 = vector.load %arg1[%c3, %c0_6] : memref<12x32xf32, #tpu.memory_space<vmem>>, vector<1x32xf32>
    %c4 = arith.constant 4 : index
    %c0_7 = arith.constant 0 : index
    %6 = vector.load %arg1[%c4, %c0_7] : memref<12x32xf32, #tpu.memory_space<vmem>>, vector<1x32xf32>
    %c5 = arith.constant 5 : index
    %c0_8 = arith.constant 0 : index
    %7 = vector.load %arg1[%c5, %c0_8] : memref<12x32xf32, #tpu.memory_space<vmem>>, vector<1x32xf32>
    %c0_9 = arith.constant 0 : index
    %c0_10 = arith.constant 0 : index
    %8 = vector.load %arg2[%c0_9, %c0_10] : memref<2x64xf32, #tpu.memory_space<vmem>>, vector<1x64xf32>
    %cst = arith.constant dense<0.000000e+00> : vector<16xf32>
    %9 = vector.multi_reduction <add>, %1, %cst [1] : vector<16x32xf32> to vector<16xf32>
    %10 = vector.shape_cast %9 : vector<16xf32> to vector<16x1xf32>
    %cst_11 = arith.constant 3.200000e+01 : f32
    %11 = vector.broadcast %cst_11 : f32 to vector<16x1xf32>
    %12 = arith.divf %10, %11 : vector<16x1xf32>
    %13 = vector.broadcast %12 : vector<16x1xf32> to vector<16x32xf32>
    %14 = arith.subf %1, %13 : vector<16x32xf32>
    %15 = arith.mulf %14, %14 : vector<16x32xf32>
    %cst_12 = arith.constant dense<0.000000e+00> : vector<16xf32>
    %16 = vector.multi_reduction <add>, %15, %cst_12 [1] : vector<16x32xf32> to vector<16xf32>
    %17 = vector.shape_cast %16 : vector<16xf32> to vector<16x1xf32>
    %cst_13 = arith.constant 3.200000e+01 : f32
    %18 = vector.broadcast %cst_13 : f32 to vector<16x1xf32>
    %19 = arith.divf %17, %18 : vector<16x1xf32>
    %20 = vector.broadcast %12 : vector<16x1xf32> to vector<16x32xf32>
    %21 = arith.subf %1, %20 : vector<16x32xf32>
    %cst_14 = arith.constant 9.99999974E-6 : f32
    %22 = vector.broadcast %cst_14 : f32 to vector<16x1xf32>
    %23 = arith.addf %19, %22 : vector<16x1xf32>
    %24 = math.rsqrt %23 : vector<16x1xf32>
    %25 = vector.broadcast %24 : vector<16x1xf32> to vector<16x32xf32>
    %26 = arith.mulf %21, %25 : vector<16x32xf32>
    %27 = vector.broadcast %2 : vector<1x32xf32> to vector<16x32xf32>
    %28 = arith.mulf %26, %27 : vector<16x32xf32>
    %29 = vector.broadcast %3 : vector<1x32xf32> to vector<16x32xf32>
    %30 = arith.addf %28, %29 : vector<16x32xf32>
    %31 = arith.truncf %30 : vector<16x32xf32> to vector<16x32xbf16>
    %c0_15 = arith.constant 0 : index
    %c0_16 = arith.constant 0 : index
    %32 = vector.load %arg3[%c0_15, %c0_16] : memref<32x192xbf16, #tpu.memory_space<vmem>>, vector<32x192xbf16>
    %cst_17 = arith.constant dense<0.000000e+00> : vector<16x192xf32>
    %33 = tpu.matmul %31, %32, %cst_17 {dimension_numbers = #tpu.dot_dimension_numbers<[1], [0], [0], [1], [0, 0, 1, 1], [], []>} : vector<16x32xbf16>, vector<32x192xbf16>, vector<16x192xf32> -> vector<16x192xf32>
    %34 = vector.extract_strided_slice %33 {offsets = [0, 0], sizes = [16, 16], strides = [1, 1]} : vector<16x192xf32> to vector<16x16xf32>
    %35 = vector.shape_cast %34 : vector<16x16xf32> to vector<2x8x16xf32>
    %36 = vector.extract_strided_slice %33 {offsets = [0, 64], sizes = [16, 16], strides = [1, 1]} : vector<16x192xf32> to vector<16x16xf32>
    %37 = vector.shape_cast %36 : vector<16x16xf32> to vector<2x8x16xf32>
    %38 = vector.extract_strided_slice %33 {offsets = [0, 128], sizes = [16, 16], strides = [1, 1]} : vector<16x192xf32> to vector<16x16xf32>
    %39 = vector.shape_cast %38 : vector<16x16xf32> to vector<2x8x16xf32>
    %40 = arith.truncf %35 : vector<2x8x16xf32> to vector<2x8x16xbf16>
    %41 = arith.truncf %37 : vector<2x8x16xf32> to vector<2x8x16xbf16>
    %cst_18 = arith.constant dense<0.000000e+00> : vector<2x8x8xf32>
    %42 = tpu.matmul %40, %41, %cst_18 {dimension_numbers = #tpu.dot_dimension_numbers<[2], [2], [1], [1], [0, 0, 0, 1, 1, 1], [0], [0]>} : vector<2x8x16xbf16>, vector<2x8x16xbf16>, vector<2x8x8xf32> -> vector<2x8x8xf32>
    %cst_19 = arith.constant 2.500000e-01 : f32
    %43 = vector.broadcast %cst_19 : f32 to vector<2x8x8xf32>
    %44 = arith.mulf %42, %43 : vector<2x8x8xf32>
    %cst_20 = arith.constant dense<0xFF800000> : vector<2x8xf32>
    %45 = vector.multi_reduction <maximumf>, %44, %cst_20 [2] : vector<2x8x8xf32> to vector<2x8xf32>
    %46 = vector.shape_cast %45 : vector<2x8xf32> to vector<2x8x1xf32>
    %47 = vector.broadcast %46 : vector<2x8x1xf32> to vector<2x8x8xf32>
    %48 = arith.subf %44, %47 : vector<2x8x8xf32>
    %49 = math.exp %48 : vector<2x8x8xf32>
    %cst_21 = arith.constant dense<0.000000e+00> : vector<2x8xf32>
    %50 = vector.multi_reduction <add>, %49, %cst_21 [2] : vector<2x8x8xf32> to vector<2x8xf32>
    %51 = vector.shape_cast %50 : vector<2x8xf32> to vector<2x8x1xf32>
    %52 = tpu.reciprocal %51 {approx = true} : vector<2x8x1xf32> -> vector<2x8x1xf32>
    %53 = vector.broadcast %52 : vector<2x8x1xf32> to vector<2x8x8xf32>
    %54 = arith.mulf %49, %53 : vector<2x8x8xf32>
    %55 = arith.truncf %54 : vector<2x8x8xf32> to vector<2x8x8xbf16>
    %56 = arith.truncf %39 : vector<2x8x16xf32> to vector<2x8x16xbf16>
    %cst_22 = arith.constant dense<0.000000e+00> : vector<2x8x16xf32>
    %57 = tpu.matmul %55, %56, %cst_22 {dimension_numbers = #tpu.dot_dimension_numbers<[2], [1], [1], [2], [0, 0, 0, 1, 1, 2], [0], [0]>} : vector<2x8x8xbf16>, vector<2x8x16xbf16>, vector<2x8x16xf32> -> vector<2x8x16xf32>
    %58 = vector.shape_cast %57 : vector<2x8x16xf32> to vector<16x16xf32>
    %59 = vector.extract_strided_slice %33 {offsets = [0, 16], sizes = [16, 16], strides = [1, 1]} : vector<16x192xf32> to vector<16x16xf32>
    %60 = vector.shape_cast %59 : vector<16x16xf32> to vector<2x8x16xf32>
    %61 = vector.extract_strided_slice %33 {offsets = [0, 80], sizes = [16, 16], strides = [1, 1]} : vector<16x192xf32> to vector<16x16xf32>
    %62 = vector.shape_cast %61 : vector<16x16xf32> to vector<2x8x16xf32>
    %63 = vector.extract_strided_slice %33 {offsets = [0, 144], sizes = [16, 16], strides = [1, 1]} : vector<16x192xf32> to vector<16x16xf32>
    %64 = vector.shape_cast %63 : vector<16x16xf32> to vector<2x8x16xf32>
    %65 = arith.truncf %60 : vector<2x8x16xf32> to vector<2x8x16xbf16>
    %66 = arith.truncf %62 : vector<2x8x16xf32> to vector<2x8x16xbf16>
    %cst_23 = arith.constant dense<0.000000e+00> : vector<2x8x8xf32>
    %67 = tpu.matmul %65, %66, %cst_23 {dimension_numbers = #tpu.dot_dimension_numbers<[2], [2], [1], [1], [0, 0, 0, 1, 1, 1], [0], [0]>} : vector<2x8x16xbf16>, vector<2x8x16xbf16>, vector<2x8x8xf32> -> vector<2x8x8xf32>
    %cst_24 = arith.constant 2.500000e-01 : f32
    %68 = vector.broadcast %cst_24 : f32 to vector<2x8x8xf32>
    %69 = arith.mulf %67, %68 : vector<2x8x8xf32>
    %cst_25 = arith.constant dense<0xFF800000> : vector<2x8xf32>
    %70 = vector.multi_reduction <maximumf>, %69, %cst_25 [2] : vector<2x8x8xf32> to vector<2x8xf32>
    %71 = vector.shape_cast %70 : vector<2x8xf32> to vector<2x8x1xf32>
    %72 = vector.broadcast %71 : vector<2x8x1xf32> to vector<2x8x8xf32>
    %73 = arith.subf %69, %72 : vector<2x8x8xf32>
    %74 = math.exp %73 : vector<2x8x8xf32>
    %cst_26 = arith.constant dense<0.000000e+00> : vector<2x8xf32>
    %75 = vector.multi_reduction <add>, %74, %cst_26 [2] : vector<2x8x8xf32> to vector<2x8xf32>
    %76 = vector.shape_cast %75 : vector<2x8xf32> to vector<2x8x1xf32>
    %77 = tpu.reciprocal %76 {approx = true} : vector<2x8x1xf32> -> vector<2x8x1xf32>
    %78 = vector.broadcast %77 : vector<2x8x1xf32> to vector<2x8x8xf32>
    %79 = arith.mulf %74, %78 : vector<2x8x8xf32>
    %80 = arith.truncf %79 : vector<2x8x8xf32> to vector<2x8x8xbf16>
    %81 = arith.truncf %64 : vector<2x8x16xf32> to vector<2x8x16xbf16>
    %cst_27 = arith.constant dense<0.000000e+00> : vector<2x8x16xf32>
    %82 = tpu.matmul %80, %81, %cst_27 {dimension_numbers = #tpu.dot_dimension_numbers<[2], [1], [1], [2], [0, 0, 0, 1, 1, 2], [0], [0]>} : vector<2x8x8xbf16>, vector<2x8x16xbf16>, vector<2x8x16xf32> -> vector<2x8x16xf32>
    %83 = vector.shape_cast %82 : vector<2x8x16xf32> to vector<16x16xf32>
    %84 = vector.extract_strided_slice %33 {offsets = [0, 32], sizes = [16, 16], strides = [1, 1]} : vector<16x192xf32> to vector<16x16xf32>
    %85 = vector.shape_cast %84 : vector<16x16xf32> to vector<2x8x16xf32>
    %86 = vector.extract_strided_slice %33 {offsets = [0, 96], sizes = [16, 16], strides = [1, 1]} : vector<16x192xf32> to vector<16x16xf32>
    %87 = vector.shape_cast %86 : vector<16x16xf32> to vector<2x8x16xf32>
    %88 = vector.extract_strided_slice %33 {offsets = [0, 160], sizes = [16, 16], strides = [1, 1]} : vector<16x192xf32> to vector<16x16xf32>
    %89 = vector.shape_cast %88 : vector<16x16xf32> to vector<2x8x16xf32>
    %90 = arith.truncf %85 : vector<2x8x16xf32> to vector<2x8x16xbf16>
    %91 = arith.truncf %87 : vector<2x8x16xf32> to vector<2x8x16xbf16>
    %cst_28 = arith.constant dense<0.000000e+00> : vector<2x8x8xf32>
    %92 = tpu.matmul %90, %91, %cst_28 {dimension_numbers = #tpu.dot_dimension_numbers<[2], [2], [1], [1], [0, 0, 0, 1, 1, 1], [0], [0]>} : vector<2x8x16xbf16>, vector<2x8x16xbf16>, vector<2x8x8xf32> -> vector<2x8x8xf32>
    %cst_29 = arith.constant 2.500000e-01 : f32
    %93 = vector.broadcast %cst_29 : f32 to vector<2x8x8xf32>
    %94 = arith.mulf %92, %93 : vector<2x8x8xf32>
    %cst_30 = arith.constant dense<0xFF800000> : vector<2x8xf32>
    %95 = vector.multi_reduction <maximumf>, %94, %cst_30 [2] : vector<2x8x8xf32> to vector<2x8xf32>
    %96 = vector.shape_cast %95 : vector<2x8xf32> to vector<2x8x1xf32>
    %97 = vector.broadcast %96 : vector<2x8x1xf32> to vector<2x8x8xf32>
    %98 = arith.subf %94, %97 : vector<2x8x8xf32>
    %99 = math.exp %98 : vector<2x8x8xf32>
    %cst_31 = arith.constant dense<0.000000e+00> : vector<2x8xf32>
    %100 = vector.multi_reduction <add>, %99, %cst_31 [2] : vector<2x8x8xf32> to vector<2x8xf32>
    %101 = vector.shape_cast %100 : vector<2x8xf32> to vector<2x8x1xf32>
    %102 = tpu.reciprocal %101 {approx = true} : vector<2x8x1xf32> -> vector<2x8x1xf32>
    %103 = vector.broadcast %102 : vector<2x8x1xf32> to vector<2x8x8xf32>
    %104 = arith.mulf %99, %103 : vector<2x8x8xf32>
    %105 = arith.truncf %104 : vector<2x8x8xf32> to vector<2x8x8xbf16>
    %106 = arith.truncf %89 : vector<2x8x16xf32> to vector<2x8x16xbf16>
    %cst_32 = arith.constant dense<0.000000e+00> : vector<2x8x16xf32>
    %107 = tpu.matmul %105, %106, %cst_32 {dimension_numbers = #tpu.dot_dimension_numbers<[2], [1], [1], [2], [0, 0, 0, 1, 1, 2], [0], [0]>} : vector<2x8x8xbf16>, vector<2x8x16xbf16>, vector<2x8x16xf32> -> vector<2x8x16xf32>
    %108 = vector.shape_cast %107 : vector<2x8x16xf32> to vector<16x16xf32>
    %109 = vector.extract_strided_slice %33 {offsets = [0, 48], sizes = [16, 16], strides = [1, 1]} : vector<16x192xf32> to vector<16x16xf32>
    %110 = vector.shape_cast %109 : vector<16x16xf32> to vector<2x8x16xf32>
    %111 = vector.extract_strided_slice %33 {offsets = [0, 112], sizes = [16, 16], strides = [1, 1]} : vector<16x192xf32> to vector<16x16xf32>
    %112 = vector.shape_cast %111 : vector<16x16xf32> to vector<2x8x16xf32>
    %113 = vector.extract_strided_slice %33 {offsets = [0, 176], sizes = [16, 16], strides = [1, 1]} : vector<16x192xf32> to vector<16x16xf32>
    %114 = vector.shape_cast %113 : vector<16x16xf32> to vector<2x8x16xf32>
    %115 = arith.truncf %110 : vector<2x8x16xf32> to vector<2x8x16xbf16>
    %116 = arith.truncf %112 : vector<2x8x16xf32> to vector<2x8x16xbf16>
    %cst_33 = arith.constant dense<0.000000e+00> : vector<2x8x8xf32>
    %117 = tpu.matmul %115, %116, %cst_33 {dimension_numbers = #tpu.dot_dimension_numbers<[2], [2], [1], [1], [0, 0, 0, 1, 1, 1], [0], [0]>} : vector<2x8x16xbf16>, vector<2x8x16xbf16>, vector<2x8x8xf32> -> vector<2x8x8xf32>
    %cst_34 = arith.constant 2.500000e-01 : f32
    %118 = vector.broadcast %cst_34 : f32 to vector<2x8x8xf32>
    %119 = arith.mulf %117, %118 : vector<2x8x8xf32>
    %cst_35 = arith.constant dense<0xFF800000> : vector<2x8xf32>
    %120 = vector.multi_reduction <maximumf>, %119, %cst_35 [2] : vector<2x8x8xf32> to vector<2x8xf32>
    %121 = vector.shape_cast %120 : vector<2x8xf32> to vector<2x8x1xf32>
    %122 = vector.broadcast %121 : vector<2x8x1xf32> to vector<2x8x8xf32>
    %123 = arith.subf %119, %122 : vector<2x8x8xf32>
    %124 = math.exp %123 : vector<2x8x8xf32>
    %cst_36 = arith.constant dense<0.000000e+00> : vector<2x8xf32>
    %125 = vector.multi_reduction <add>, %124, %cst_36 [2] : vector<2x8x8xf32> to vector<2x8xf32>
    %126 = vector.shape_cast %125 : vector<2x8xf32> to vector<2x8x1xf32>
    %127 = tpu.reciprocal %126 {approx = true} : vector<2x8x1xf32> -> vector<2x8x1xf32>
    %128 = vector.broadcast %127 : vector<2x8x1xf32> to vector<2x8x8xf32>
    %129 = arith.mulf %124, %128 : vector<2x8x8xf32>
    %130 = arith.truncf %129 : vector<2x8x8xf32> to vector<2x8x8xbf16>
    %131 = arith.truncf %114 : vector<2x8x16xf32> to vector<2x8x16xbf16>
    %cst_37 = arith.constant dense<0.000000e+00> : vector<2x8x16xf32>
    %132 = tpu.matmul %130, %131, %cst_37 {dimension_numbers = #tpu.dot_dimension_numbers<[2], [1], [1], [2], [0, 0, 0, 1, 1, 2], [0], [0]>} : vector<2x8x8xbf16>, vector<2x8x16xbf16>, vector<2x8x16xf32> -> vector<2x8x16xf32>
    %133 = vector.shape_cast %132 : vector<2x8x16xf32> to vector<16x16xf32>
    %134 = tpu.concatenate %58, %83, %108, %133 in 1 : vector<16x16xf32>, vector<16x16xf32>, vector<16x16xf32>, vector<16x16xf32> -> vector<16x64xf32>
    %135 = arith.truncf %134 : vector<16x64xf32> to vector<16x64xbf16>
    %c0_38 = arith.constant 0 : index
    %c0_39 = arith.constant 0 : index
    %136 = vector.load %arg4[%c0_38, %c0_39] : memref<64x32xbf16, #tpu.memory_space<vmem>>, vector<64x32xbf16>
    %cst_40 = arith.constant dense<0.000000e+00> : vector<16x32xf32>
    %137 = tpu.matmul %135, %136, %cst_40 {dimension_numbers = #tpu.dot_dimension_numbers<[1], [0], [0], [1], [0, 0, 1, 1], [], []>} : vector<16x64xbf16>, vector<64x32xbf16>, vector<16x32xf32> -> vector<16x32xf32>
    %138 = vector.broadcast %4 : vector<1x32xf32> to vector<16x32xf32>
    %139 = arith.addf %137, %138 : vector<16x32xf32>
    %140 = arith.addf %139, %1 : vector<16x32xf32>
    %cst_41 = arith.constant dense<0.000000e+00> : vector<16xf32>
    %141 = vector.multi_reduction <add>, %140, %cst_41 [1] : vector<16x32xf32> to vector<16xf32>
    %142 = vector.shape_cast %141 : vector<16xf32> to vector<16x1xf32>
    %cst_42 = arith.constant 3.200000e+01 : f32
    %143 = vector.broadcast %cst_42 : f32 to vector<16x1xf32>
    %144 = arith.divf %142, %143 : vector<16x1xf32>
    %145 = vector.broadcast %144 : vector<16x1xf32> to vector<16x32xf32>
    %146 = arith.subf %140, %145 : vector<16x32xf32>
    %147 = arith.mulf %146, %146 : vector<16x32xf32>
    %cst_43 = arith.constant dense<0.000000e+00> : vector<16xf32>
    %148 = vector.multi_reduction <add>, %147, %cst_43 [1] : vector<16x32xf32> to vector<16xf32>
    %149 = vector.shape_cast %148 : vector<16xf32> to vector<16x1xf32>
    %cst_44 = arith.constant 3.200000e+01 : f32
    %150 = vector.broadcast %cst_44 : f32 to vector<16x1xf32>
    %151 = arith.divf %149, %150 : vector<16x1xf32>
    %152 = vector.broadcast %144 : vector<16x1xf32> to vector<16x32xf32>
    %153 = arith.subf %140, %152 : vector<16x32xf32>
    %cst_45 = arith.constant 9.99999974E-6 : f32
    %154 = vector.broadcast %cst_45 : f32 to vector<16x1xf32>
    %155 = arith.addf %151, %154 : vector<16x1xf32>
    %156 = math.rsqrt %155 : vector<16x1xf32>
    %157 = vector.broadcast %156 : vector<16x1xf32> to vector<16x32xf32>
    %158 = arith.mulf %153, %157 : vector<16x32xf32>
    %159 = vector.broadcast %5 : vector<1x32xf32> to vector<16x32xf32>
    %160 = arith.mulf %158, %159 : vector<16x32xf32>
    %161 = vector.broadcast %6 : vector<1x32xf32> to vector<16x32xf32>
    %162 = arith.addf %160, %161 : vector<16x32xf32>
    %163 = arith.truncf %162 : vector<16x32xf32> to vector<16x32xbf16>
    %c0_46 = arith.constant 0 : index
    %c0_47 = arith.constant 0 : index
    %164 = vector.load %arg5[%c0_46, %c0_47] : memref<32x64xbf16, #tpu.memory_space<vmem>>, vector<32x64xbf16>
    %cst_48 = arith.constant dense<0.000000e+00> : vector<16x64xf32>
    %165 = tpu.matmul %163, %164, %cst_48 {dimension_numbers = #tpu.dot_dimension_numbers<[1], [0], [0], [1], [0, 0, 1, 1], [], []>} : vector<16x32xbf16>, vector<32x64xbf16>, vector<16x64xf32> -> vector<16x64xf32>
    %166 = vector.broadcast %8 : vector<1x64xf32> to vector<16x64xf32>
    %167 = arith.addf %165, %166 : vector<16x64xf32>
    %cst_49 = arith.constant 5.000000e-01 : f32
    %168 = vector.broadcast %cst_49 : f32 to vector<16x64xf32>
    %169 = arith.mulf %168, %167 : vector<16x64xf32>
    %cst_50 = arith.constant 0.707106769 : f32
    %170 = vector.broadcast %cst_50 : f32 to vector<16x64xf32>
    %171 = arith.mulf %167, %170 : vector<16x64xf32>
    %172 = math.absf %171 : vector<16x64xf32>
    %cst_51 = arith.constant 0.327591091 : f32
    %173 = vector.broadcast %cst_51 : f32 to vector<16x64xf32>
    %174 = arith.mulf %173, %172 : vector<16x64xf32>
    %cst_52 = arith.constant 1.000000e+00 : f32
    %175 = vector.broadcast %cst_52 : f32 to vector<16x64xf32>
    %176 = arith.addf %175, %174 : vector<16x64xf32>
    %cst_53 = arith.constant 1.000000e+00 : f32
    %177 = vector.broadcast %cst_53 : f32 to vector<16x64xf32>
    %178 = arith.divf %177, %176 : vector<16x64xf32>
    %cst_54 = arith.constant 1.06140542 : f32
    %179 = vector.broadcast %cst_54 : f32 to vector<16x64xf32>
    %180 = arith.mulf %178, %179 : vector<16x64xf32>
    %cst_55 = arith.constant -1.45315206 : f32
    %181 = vector.broadcast %cst_55 : f32 to vector<16x64xf32>
    %182 = arith.addf %181, %180 : vector<16x64xf32>
    %183 = arith.mulf %178, %182 : vector<16x64xf32>
    %cst_56 = arith.constant 1.42141378 : f32
    %184 = vector.broadcast %cst_56 : f32 to vector<16x64xf32>
    %185 = arith.addf %184, %183 : vector<16x64xf32>
    %186 = arith.mulf %178, %185 : vector<16x64xf32>
    %cst_57 = arith.constant -0.284496725 : f32
    %187 = vector.broadcast %cst_57 : f32 to vector<16x64xf32>
    %188 = arith.addf %187, %186 : vector<16x64xf32>
    %189 = arith.mulf %178, %188 : vector<16x64xf32>
    %cst_58 = arith.constant 0.254829586 : f32
    %190 = vector.broadcast %cst_58 : f32 to vector<16x64xf32>
    %191 = arith.addf %190, %189 : vector<16x64xf32>
    %192 = arith.mulf %178, %191 : vector<16x64xf32>
    %cst_59 = arith.constant 0.000000e+00 : f32
    %193 = vector.broadcast %cst_59 : f32 to vector<16x64xf32>
    %194 = arith.subf %193, %172 : vector<16x64xf32>
    %195 = arith.mulf %194, %172 : vector<16x64xf32>
    %196 = math.exp %195 : vector<16x64xf32>
    %197 = arith.mulf %192, %196 : vector<16x64xf32>
    %cst_60 = arith.constant 1.000000e+00 : f32
    %198 = vector.broadcast %cst_60 : f32 to vector<16x64xf32>
    %199 = arith.subf %198, %197 : vector<16x64xf32>
    %cst_61 = arith.constant 0.000000e+00 : f32
    %200 = vector.broadcast %cst_61 : f32 to vector<16x64xf32>
    %201 = arith.cmpf oge, %171, %200 : vector<16x64xf32>
    %cst_62 = arith.constant 0.000000e+00 : f32
    %202 = vector.broadcast %cst_62 : f32 to vector<16x64xf32>
    %203 = arith.subf %202, %199 : vector<16x64xf32>
    %204 = arith.select %201, %199, %203 : vector<16x64xi1>, vector<16x64xf32>
    %cst_63 = arith.constant 1.000000e+00 : f32
    %205 = vector.broadcast %cst_63 : f32 to vector<16x64xf32>
    %206 = arith.addf %205, %204 : vector<16x64xf32>
    %207 = arith.mulf %169, %206 : vector<16x64xf32>
    %208 = arith.truncf %207 : vector<16x64xf32> to vector<16x64xbf16>
    %c0_64 = arith.constant 0 : index
    %c0_65 = arith.constant 0 : index
    %209 = vector.load %arg6[%c0_64, %c0_65] : memref<64x32xbf16, #tpu.memory_space<vmem>>, vector<64x32xbf16>
    %cst_66 = arith.constant dense<0.000000e+00> : vector<16x32xf32>
    %210 = tpu.matmul %208, %209, %cst_66 {dimension_numbers = #tpu.dot_dimension_numbers<[1], [0], [0], [1], [0, 0, 1, 1], [], []>} : vector<16x64xbf16>, vector<64x32xbf16>, vector<16x32xf32> -> vector<16x32xf32>
    %211 = vector.broadcast %7 : vector<1x32xf32> to vector<16x32xf32>
    %212 = arith.addf %210, %211 : vector<16x32xf32>
    %213 = arith.addf %212, %140 : vector<16x32xf32>
    %c6 = arith.constant 6 : index
    %c0_67 = arith.constant 0 : index
    %214 = vector.load %arg1[%c6, %c0_67] : memref<12x32xf32, #tpu.memory_space<vmem>>, vector<1x32xf32>
    %c7 = arith.constant 7 : index
    %c0_68 = arith.constant 0 : index
    %215 = vector.load %arg1[%c7, %c0_68] : memref<12x32xf32, #tpu.memory_space<vmem>>, vector<1x32xf32>
    %c8 = arith.constant 8 : index
    %c0_69 = arith.constant 0 : index
    %216 = vector.load %arg1[%c8, %c0_69] : memref<12x32xf32, #tpu.memory_space<vmem>>, vector<1x32xf32>
    %c9 = arith.constant 9 : index
    %c0_70 = arith.constant 0 : index
    %217 = vector.load %arg1[%c9, %c0_70] : memref<12x32xf32, #tpu.memory_space<vmem>>, vector<1x32xf32>
    %c10 = arith.constant 10 : index
    %c0_71 = arith.constant 0 : index
    %218 = vector.load %arg1[%c10, %c0_71] : memref<12x32xf32, #tpu.memory_space<vmem>>, vector<1x32xf32>
    %c11 = arith.constant 11 : index
    %c0_72 = arith.constant 0 : index
    %219 = vector.load %arg1[%c11, %c0_72] : memref<12x32xf32, #tpu.memory_space<vmem>>, vector<1x32xf32>
    %c1_73 = arith.constant 1 : index
    %c0_74 = arith.constant 0 : index
    %220 = vector.load %arg2[%c1_73, %c0_74] : memref<2x64xf32, #tpu.memory_space<vmem>>, vector<1x64xf32>
    %cst_75 = arith.constant dense<0.000000e+00> : vector<16xf32>
    %221 = vector.multi_reduction <add>, %213, %cst_75 [1] : vector<16x32xf32> to vector<16xf32>
    %222 = vector.shape_cast %221 : vector<16xf32> to vector<16x1xf32>
    %cst_76 = arith.constant 3.200000e+01 : f32
    %223 = vector.broadcast %cst_76 : f32 to vector<16x1xf32>
    %224 = arith.divf %222, %223 : vector<16x1xf32>
    %225 = vector.broadcast %224 : vector<16x1xf32> to vector<16x32xf32>
    %226 = arith.subf %213, %225 : vector<16x32xf32>
    %227 = arith.mulf %226, %226 : vector<16x32xf32>
    %cst_77 = arith.constant dense<0.000000e+00> : vector<16xf32>
    %228 = vector.multi_reduction <add>, %227, %cst_77 [1] : vector<16x32xf32> to vector<16xf32>
    %229 = vector.shape_cast %228 : vector<16xf32> to vector<16x1xf32>
    %cst_78 = arith.constant 3.200000e+01 : f32
    %230 = vector.broadcast %cst_78 : f32 to vector<16x1xf32>
    %231 = arith.divf %229, %230 : vector<16x1xf32>
    %232 = vector.broadcast %224 : vector<16x1xf32> to vector<16x32xf32>
    %233 = arith.subf %213, %232 : vector<16x32xf32>
    %cst_79 = arith.constant 9.99999974E-6 : f32
    %234 = vector.broadcast %cst_79 : f32 to vector<16x1xf32>
    %235 = arith.addf %231, %234 : vector<16x1xf32>
    %236 = math.rsqrt %235 : vector<16x1xf32>
    %237 = vector.broadcast %236 : vector<16x1xf32> to vector<16x32xf32>
    %238 = arith.mulf %233, %237 : vector<16x32xf32>
    %239 = vector.broadcast %214 : vector<1x32xf32> to vector<16x32xf32>
    %240 = arith.mulf %238, %239 : vector<16x32xf32>
    %241 = vector.broadcast %215 : vector<1x32xf32> to vector<16x32xf32>
    %242 = arith.addf %240, %241 : vector<16x32xf32>
    %243 = arith.truncf %242 : vector<16x32xf32> to vector<16x32xbf16>
    %c0_80 = arith.constant 0 : index
    %c0_81 = arith.constant 0 : index
    %244 = vector.load %arg7[%c0_80, %c0_81] : memref<32x96xbf16, #tpu.memory_space<vmem>>, vector<32x96xbf16>
    %cst_82 = arith.constant dense<0.000000e+00> : vector<16x96xf32>
    %245 = tpu.matmul %243, %244, %cst_82 {dimension_numbers = #tpu.dot_dimension_numbers<[1], [0], [0], [1], [0, 0, 1, 1], [], []>} : vector<16x32xbf16>, vector<32x96xbf16>, vector<16x96xf32> -> vector<16x96xf32>
    %246 = vector.extract_strided_slice %245 {offsets = [0, 0], sizes = [16, 16], strides = [1, 1]} : vector<16x96xf32> to vector<16x16xf32>
    %247 = vector.shape_cast %246 : vector<16x16xf32> to vector<2x8x16xf32>
    %248 = vector.extract_strided_slice %245 {offsets = [0, 32], sizes = [16, 16], strides = [1, 1]} : vector<16x96xf32> to vector<16x16xf32>
    %249 = vector.shape_cast %248 : vector<16x16xf32> to vector<2x8x16xf32>
    %250 = vector.extract_strided_slice %245 {offsets = [0, 64], sizes = [16, 16], strides = [1, 1]} : vector<16x96xf32> to vector<16x16xf32>
    %251 = vector.shape_cast %250 : vector<16x16xf32> to vector<2x8x16xf32>
    %252 = arith.truncf %247 : vector<2x8x16xf32> to vector<2x8x16xbf16>
    %253 = arith.truncf %249 : vector<2x8x16xf32> to vector<2x8x16xbf16>
    %cst_83 = arith.constant dense<0.000000e+00> : vector<2x8x8xf32>
    %254 = tpu.matmul %252, %253, %cst_83 {dimension_numbers = #tpu.dot_dimension_numbers<[2], [2], [1], [1], [0, 0, 0, 1, 1, 1], [0], [0]>} : vector<2x8x16xbf16>, vector<2x8x16xbf16>, vector<2x8x8xf32> -> vector<2x8x8xf32>
    %cst_84 = arith.constant 2.500000e-01 : f32
    %255 = vector.broadcast %cst_84 : f32 to vector<2x8x8xf32>
    %256 = arith.mulf %254, %255 : vector<2x8x8xf32>
    %cst_85 = arith.constant dense<0xFF800000> : vector<2x8xf32>
    %257 = vector.multi_reduction <maximumf>, %256, %cst_85 [2] : vector<2x8x8xf32> to vector<2x8xf32>
    %258 = vector.shape_cast %257 : vector<2x8xf32> to vector<2x8x1xf32>
    %259 = vector.broadcast %258 : vector<2x8x1xf32> to vector<2x8x8xf32>
    %260 = arith.subf %256, %259 : vector<2x8x8xf32>
    %261 = math.exp %260 : vector<2x8x8xf32>
    %cst_86 = arith.constant dense<0.000000e+00> : vector<2x8xf32>
    %262 = vector.multi_reduction <add>, %261, %cst_86 [2] : vector<2x8x8xf32> to vector<2x8xf32>
    %263 = vector.shape_cast %262 : vector<2x8xf32> to vector<2x8x1xf32>
    %264 = tpu.reciprocal %263 {approx = true} : vector<2x8x1xf32> -> vector<2x8x1xf32>
    %265 = vector.broadcast %264 : vector<2x8x1xf32> to vector<2x8x8xf32>
    %266 = arith.mulf %261, %265 : vector<2x8x8xf32>
    %267 = arith.truncf %266 : vector<2x8x8xf32> to vector<2x8x8xbf16>
    %268 = arith.truncf %251 : vector<2x8x16xf32> to vector<2x8x16xbf16>
    %cst_87 = arith.constant dense<0.000000e+00> : vector<2x8x16xf32>
    %269 = tpu.matmul %267, %268, %cst_87 {dimension_numbers = #tpu.dot_dimension_numbers<[2], [1], [1], [2], [0, 0, 0, 1, 1, 2], [0], [0]>} : vector<2x8x8xbf16>, vector<2x8x16xbf16>, vector<2x8x16xf32> -> vector<2x8x16xf32>
    %270 = vector.shape_cast %269 : vector<2x8x16xf32> to vector<16x16xf32>
    %271 = vector.extract_strided_slice %245 {offsets = [0, 16], sizes = [16, 16], strides = [1, 1]} : vector<16x96xf32> to vector<16x16xf32>
    %272 = vector.shape_cast %271 : vector<16x16xf32> to vector<2x8x16xf32>
    %273 = vector.extract_strided_slice %245 {offsets = [0, 48], sizes = [16, 16], strides = [1, 1]} : vector<16x96xf32> to vector<16x16xf32>
    %274 = vector.shape_cast %273 : vector<16x16xf32> to vector<2x8x16xf32>
    %275 = vector.extract_strided_slice %245 {offsets = [0, 80], sizes = [16, 16], strides = [1, 1]} : vector<16x96xf32> to vector<16x16xf32>
    %276 = vector.shape_cast %275 : vector<16x16xf32> to vector<2x8x16xf32>
    %277 = arith.truncf %272 : vector<2x8x16xf32> to vector<2x8x16xbf16>
    %278 = arith.truncf %274 : vector<2x8x16xf32> to vector<2x8x16xbf16>
    %cst_88 = arith.constant dense<0.000000e+00> : vector<2x8x8xf32>
    %279 = tpu.matmul %277, %278, %cst_88 {dimension_numbers = #tpu.dot_dimension_numbers<[2], [2], [1], [1], [0, 0, 0, 1, 1, 1], [0], [0]>} : vector<2x8x16xbf16>, vector<2x8x16xbf16>, vector<2x8x8xf32> -> vector<2x8x8xf32>
    %cst_89 = arith.constant 2.500000e-01 : f32
    %280 = vector.broadcast %cst_89 : f32 to vector<2x8x8xf32>
    %281 = arith.mulf %279, %280 : vector<2x8x8xf32>
    %cst_90 = arith.constant dense<0xFF800000> : vector<2x8xf32>
    %282 = vector.multi_reduction <maximumf>, %281, %cst_90 [2] : vector<2x8x8xf32> to vector<2x8xf32>
    %283 = vector.shape_cast %282 : vector<2x8xf32> to vector<2x8x1xf32>
    %284 = vector.broadcast %283 : vector<2x8x1xf32> to vector<2x8x8xf32>
    %285 = arith.subf %281, %284 : vector<2x8x8xf32>
    %286 = math.exp %285 : vector<2x8x8xf32>
    %cst_91 = arith.constant dense<0.000000e+00> : vector<2x8xf32>
    %287 = vector.multi_reduction <add>, %286, %cst_91 [2] : vector<2x8x8xf32> to vector<2x8xf32>
    %288 = vector.shape_cast %287 : vector<2x8xf32> to vector<2x8x1xf32>
    %289 = tpu.reciprocal %288 {approx = true} : vector<2x8x1xf32> -> vector<2x8x1xf32>
    %290 = vector.broadcast %289 : vector<2x8x1xf32> to vector<2x8x8xf32>
    %291 = arith.mulf %286, %290 : vector<2x8x8xf32>
    %292 = arith.truncf %291 : vector<2x8x8xf32> to vector<2x8x8xbf16>
    %293 = arith.truncf %276 : vector<2x8x16xf32> to vector<2x8x16xbf16>
    %cst_92 = arith.constant dense<0.000000e+00> : vector<2x8x16xf32>
    %294 = tpu.matmul %292, %293, %cst_92 {dimension_numbers = #tpu.dot_dimension_numbers<[2], [1], [1], [2], [0, 0, 0, 1, 1, 2], [0], [0]>} : vector<2x8x8xbf16>, vector<2x8x16xbf16>, vector<2x8x16xf32> -> vector<2x8x16xf32>
    %295 = vector.shape_cast %294 : vector<2x8x16xf32> to vector<16x16xf32>
    %296 = tpu.concatenate %270, %295 in 1 : vector<16x16xf32>, vector<16x16xf32> -> vector<16x32xf32>
    %297 = arith.truncf %296 : vector<16x32xf32> to vector<16x32xbf16>
    %c0_93 = arith.constant 0 : index
    %c0_94 = arith.constant 0 : index
    %298 = vector.load %arg8[%c0_93, %c0_94] : memref<32x32xbf16, #tpu.memory_space<vmem>>, vector<32x32xbf16>
    %cst_95 = arith.constant dense<0.000000e+00> : vector<16x32xf32>
    %299 = tpu.matmul %297, %298, %cst_95 {dimension_numbers = #tpu.dot_dimension_numbers<[1], [0], [0], [1], [0, 0, 1, 1], [], []>} : vector<16x32xbf16>, vector<32x32xbf16>, vector<16x32xf32> -> vector<16x32xf32>
    %300 = vector.broadcast %216 : vector<1x32xf32> to vector<16x32xf32>
    %301 = arith.addf %299, %300 : vector<16x32xf32>
    %302 = arith.addf %301, %213 : vector<16x32xf32>
    %cst_96 = arith.constant dense<0.000000e+00> : vector<16xf32>
    %303 = vector.multi_reduction <add>, %302, %cst_96 [1] : vector<16x32xf32> to vector<16xf32>
    %304 = vector.shape_cast %303 : vector<16xf32> to vector<16x1xf32>
    %cst_97 = arith.constant 3.200000e+01 : f32
    %305 = vector.broadcast %cst_97 : f32 to vector<16x1xf32>
    %306 = arith.divf %304, %305 : vector<16x1xf32>
    %307 = vector.broadcast %306 : vector<16x1xf32> to vector<16x32xf32>
    %308 = arith.subf %302, %307 : vector<16x32xf32>
    %309 = arith.mulf %308, %308 : vector<16x32xf32>
    %cst_98 = arith.constant dense<0.000000e+00> : vector<16xf32>
    %310 = vector.multi_reduction <add>, %309, %cst_98 [1] : vector<16x32xf32> to vector<16xf32>
    %311 = vector.shape_cast %310 : vector<16xf32> to vector<16x1xf32>
    %cst_99 = arith.constant 3.200000e+01 : f32
    %312 = vector.broadcast %cst_99 : f32 to vector<16x1xf32>
    %313 = arith.divf %311, %312 : vector<16x1xf32>
    %314 = vector.broadcast %306 : vector<16x1xf32> to vector<16x32xf32>
    %315 = arith.subf %302, %314 : vector<16x32xf32>
    %cst_100 = arith.constant 9.99999974E-6 : f32
    %316 = vector.broadcast %cst_100 : f32 to vector<16x1xf32>
    %317 = arith.addf %313, %316 : vector<16x1xf32>
    %318 = math.rsqrt %317 : vector<16x1xf32>
    %319 = vector.broadcast %318 : vector<16x1xf32> to vector<16x32xf32>
    %320 = arith.mulf %315, %319 : vector<16x32xf32>
    %321 = vector.broadcast %217 : vector<1x32xf32> to vector<16x32xf32>
    %322 = arith.mulf %320, %321 : vector<16x32xf32>
    %323 = vector.broadcast %218 : vector<1x32xf32> to vector<16x32xf32>
    %324 = arith.addf %322, %323 : vector<16x32xf32>
    %325 = arith.truncf %324 : vector<16x32xf32> to vector<16x32xbf16>
    %c0_101 = arith.constant 0 : index
    %c0_102 = arith.constant 0 : index
    %326 = vector.load %arg9[%c0_101, %c0_102] : memref<32x64xbf16, #tpu.memory_space<vmem>>, vector<32x64xbf16>
    %cst_103 = arith.constant dense<0.000000e+00> : vector<16x64xf32>
    %327 = tpu.matmul %325, %326, %cst_103 {dimension_numbers = #tpu.dot_dimension_numbers<[1], [0], [0], [1], [0, 0, 1, 1], [], []>} : vector<16x32xbf16>, vector<32x64xbf16>, vector<16x64xf32> -> vector<16x64xf32>
    %328 = vector.broadcast %220 : vector<1x64xf32> to vector<16x64xf32>
    %329 = arith.addf %327, %328 : vector<16x64xf32>
    %cst_104 = arith.constant 5.000000e-01 : f32
    %330 = vector.broadcast %cst_104 : f32 to vector<16x64xf32>
    %331 = arith.mulf %330, %329 : vector<16x64xf32>
    %cst_105 = arith.constant 0.707106769 : f32
    %332 = vector.broadcast %cst_105 : f32 to vector<16x64xf32>
    %333 = arith.mulf %329, %332 : vector<16x64xf32>
    %334 = math.absf %333 : vector<16x64xf32>
    %cst_106 = arith.constant 0.327591091 : f32
    %335 = vector.broadcast %cst_106 : f32 to vector<16x64xf32>
    %336 = arith.mulf %335, %334 : vector<16x64xf32>
    %cst_107 = arith.constant 1.000000e+00 : f32
    %337 = vector.broadcast %cst_107 : f32 to vector<16x64xf32>
    %338 = arith.addf %337, %336 : vector<16x64xf32>
    %cst_108 = arith.constant 1.000000e+00 : f32
    %339 = vector.broadcast %cst_108 : f32 to vector<16x64xf32>
    %340 = arith.divf %339, %338 : vector<16x64xf32>
    %cst_109 = arith.constant 1.06140542 : f32
    %341 = vector.broadcast %cst_109 : f32 to vector<16x64xf32>
    %342 = arith.mulf %340, %341 : vector<16x64xf32>
    %cst_110 = arith.constant -1.45315206 : f32
    %343 = vector.broadcast %cst_110 : f32 to vector<16x64xf32>
    %344 = arith.addf %343, %342 : vector<16x64xf32>
    %345 = arith.mulf %340, %344 : vector<16x64xf32>
    %cst_111 = arith.constant 1.42141378 : f32
    %346 = vector.broadcast %cst_111 : f32 to vector<16x64xf32>
    %347 = arith.addf %346, %345 : vector<16x64xf32>
    %348 = arith.mulf %340, %347 : vector<16x64xf32>
    %cst_112 = arith.constant -0.284496725 : f32
    %349 = vector.broadcast %cst_112 : f32 to vector<16x64xf32>
    %350 = arith.addf %349, %348 : vector<16x64xf32>
    %351 = arith.mulf %340, %350 : vector<16x64xf32>
    %cst_113 = arith.constant 0.254829586 : f32
    %352 = vector.broadcast %cst_113 : f32 to vector<16x64xf32>
    %353 = arith.addf %352, %351 : vector<16x64xf32>
    %354 = arith.mulf %340, %353 : vector<16x64xf32>
    %cst_114 = arith.constant 0.000000e+00 : f32
    %355 = vector.broadcast %cst_114 : f32 to vector<16x64xf32>
    %356 = arith.subf %355, %334 : vector<16x64xf32>
    %357 = arith.mulf %356, %334 : vector<16x64xf32>
    %358 = math.exp %357 : vector<16x64xf32>
    %359 = arith.mulf %354, %358 : vector<16x64xf32>
    %cst_115 = arith.constant 1.000000e+00 : f32
    %360 = vector.broadcast %cst_115 : f32 to vector<16x64xf32>
    %361 = arith.subf %360, %359 : vector<16x64xf32>
    %cst_116 = arith.constant 0.000000e+00 : f32
    %362 = vector.broadcast %cst_116 : f32 to vector<16x64xf32>
    %363 = arith.cmpf oge, %333, %362 : vector<16x64xf32>
    %cst_117 = arith.constant 0.000000e+00 : f32
    %364 = vector.broadcast %cst_117 : f32 to vector<16x64xf32>
    %365 = arith.subf %364, %361 : vector<16x64xf32>
    %366 = arith.select %363, %361, %365 : vector<16x64xi1>, vector<16x64xf32>
    %cst_118 = arith.constant 1.000000e+00 : f32
    %367 = vector.broadcast %cst_118 : f32 to vector<16x64xf32>
    %368 = arith.addf %367, %366 : vector<16x64xf32>
    %369 = arith.mulf %331, %368 : vector<16x64xf32>
    %370 = arith.truncf %369 : vector<16x64xf32> to vector<16x64xbf16>
    %c0_119 = arith.constant 0 : index
    %c0_120 = arith.constant 0 : index
    %371 = vector.load %arg10[%c0_119, %c0_120] : memref<64x32xbf16, #tpu.memory_space<vmem>>, vector<64x32xbf16>
    %cst_121 = arith.constant dense<0.000000e+00> : vector<16x32xf32>
    %372 = tpu.matmul %370, %371, %cst_121 {dimension_numbers = #tpu.dot_dimension_numbers<[1], [0], [0], [1], [0, 0, 1, 1], [], []>} : vector<16x64xbf16>, vector<64x32xbf16>, vector<16x32xf32> -> vector<16x32xf32>
    %373 = vector.broadcast %219 : vector<1x32xf32> to vector<16x32xf32>
    %374 = arith.addf %372, %373 : vector<16x32xf32>
    %375 = arith.addf %374, %302 : vector<16x32xf32>
    %376 = vector.shape_cast %375 : vector<16x32xf32> to vector<2x8x32xf32>
    %c0_122 = arith.constant 0 : index
    %c0_123 = arith.constant 0 : index
    %c0_124 = arith.constant 0 : index
    %377 = vector.load %arg11[%c0_122, %c0_123, %c0_124] : memref<2x8x32xf32, #tpu.memory_space<vmem>>, vector<2x8x32xf32>
    tpu.vector_store %arg11[%c0_122, %c0_123, %c0_124], %376 {strides = array<i32>} : memref<2x8x32xf32, #tpu.memory_space<vmem>>, vector<2x8x32xf32>,
    return
  }
}

</mosaic_0001>

<llo_original>
// kernel: transformer_forward.1
$region0: #{transformer_forward.1}
  #allocation0 [shape = 'u32[]', space=smem, size = 0x4, offset = 0x4, fixed_abs, tag = 'smem constant byte address 0x4 - core index']
  #allocation1 [shape = 'u32[72,128]{1,0:T(1,128)}', space=vmem, size = 0x9000, scoped, tag = 'internal scratch']
  %s0 = inlined_call_operand.vmem [shape: f32[2,8,32], index: 0, kind: input, shape index: {}]
  %s1 = inlined_call_operand.vmem [shape: f32[12,32], index: 1, kind: input, shape index: {}]
  %s2 = inlined_call_operand.vmem [shape: f32[2,64], index: 2, kind: input, shape index: {}]
  %s3 = inlined_call_operand.vmem [shape: bf16[32,192], index: 3, kind: input, shape index: {}]
  %s4 = inlined_call_operand.vmem [shape: bf16[64,32], index: 4, kind: input, shape index: {}]
  %s5 = inlined_call_operand.vmem [shape: bf16[32,64], index: 5, kind: input, shape index: {}]
  %s6 = inlined_call_operand.vmem [shape: bf16[64,32], index: 6, kind: input, shape index: {}]
  %s7 = inlined_call_operand.vmem [shape: bf16[32,96], index: 7, kind: input, shape index: {}]
  %s8 = inlined_call_operand.vmem [shape: bf16[32,32], index: 8, kind: input, shape index: {}]
  %s9 = inlined_call_operand.vmem [shape: bf16[32,64], index: 9, kind: input, shape index: {}]
  %s10 = inlined_call_operand.vmem [shape: bf16[64,32], index: 10, kind: input, shape index: {}]
  %s11 = inlined_call_operand.hbm [shape: f32[2,8,32], index: 11, kind: output, shape index: {}]
  %s12 = sld [smem:[#allocation0]]
  $region54: #{transformer_forward.1} parent=0
    _
  %s14 = ssub.s32 1, %s12
  %s15 = scalar_select 0, %s14, %s12
  $region1: #{transformer_forward.1} parent=0
    #allocation2 [shape = 'u8[8192]{0}', space=vmem, size = 0x2000, scoped, tag = 'output window, operand 0, single buffered']
    #allocation3 [shape = 's32[1]{0}', space=sflag, size = 0x4, scoped, tag = 'scoped memory for transformer_forward.1']
    %16 = vsyncpa [#allocation3], 0
    // Predicated region
    $region2: #{transformer_forward.1} parent=1 // pred_check
      _
    $region3: #{transformer_forward.1} parent=1 // pred_check_branch
      %18 = sbr.rel (0) target = $region5
    $region4: #{transformer_forward.1} parent=1 // pred_region
      _
    $region5: #{transformer_forward.1} parent=1 // pred_fallthru
      _
    // Predicated region
    $region6: #{transformer_forward.1} parent=1 // pred_check
      _
    $region7: #{transformer_forward.1} parent=1 // pred_check_branch
      %20 = sbr.rel (0) target = $region9
    $region8: #{transformer_forward.1} parent=1 // pred_region
      _
    $region9: #{transformer_forward.1} parent=1 // pred_fallthru
      _
    // Predicated region
    $region10: #{transformer_forward.1} parent=1 // pred_check
      _
    $region11: #{transformer_forward.1} parent=1 // pred_check_branch
      %22 = sbr.rel (0) target = $region13
    $region12: #{transformer_forward.1} parent=1 // pred_region
      _
    $region13: #{transformer_forward.1} parent=1 // pred_fallthru
      _
    // Predicated region
    $region14: #{transformer_forward.1} parent=1 // pred_check
      _
    $region15: #{transformer_forward.1} parent=1 // pred_check_branch
      %24 = sbr.rel (0) target = $region17
    $region16: #{transformer_forward.1} parent=1 // pred_region
      _
    $region17: #{transformer_forward.1} parent=1 // pred_fallthru
      _
    // Predicated region
    $region18: #{transformer_forward.1} parent=1 // pred_check
      _
    $region19: #{transformer_forward.1} parent=1 // pred_check_branch
      %26 = sbr.rel (0) target = $region21
    $region20: #{transformer_forward.1} parent=1 // pred_region
      _
    $region21: #{transformer_forward.1} parent=1 // pred_fallthru
      _
    // Predicated region
    $region22: #{transformer_forward.1} parent=1 // pred_check
      _
    $region23: #{transformer_forward.1} parent=1 // pred_check_branch
      %28 = sbr.rel (0) target = $region25
    $region24: #{transformer_forward.1} parent=1 // pred_region
      _
    $region25: #{transformer_forward.1} parent=1 // pred_fallthru
      _
    // Predicated region
    $region26: #{transformer_forward.1} parent=1 // pred_check
      _
    $region27: #{transformer_forward.1} parent=1 // pred_check_branch
      %30 = sbr.rel (0) target = $region29
    $region28: #{transformer_forward.1} parent=1 // pred_region
      _
    $region29: #{transformer_forward.1} parent=1 // pred_fallthru
      _
    // Predicated region
    $region30: #{transformer_forward.1} parent=1 // pred_check
      _
    $region31: #{transformer_forward.1} parent=1 // pred_check_branch
      %32 = sbr.rel (0) target = $region33
    $region32: #{transformer_forward.1} parent=1 // pred_region
      _
    $region33: #{transformer_forward.1} parent=1 // pred_fallthru
      _
    // Predicated region
    $region34: #{transformer_forward.1} parent=1 // pred_check
      _
    $region35: #{transformer_forward.1} parent=1 // pred_check_branch
      %34 = sbr.rel (0) target = $region37
    $region36: #{transformer_forward.1} parent=1 // pred_region
      _
    $region37: #{transformer_forward.1} parent=1 // pred_fallthru
      _
    // Predicated region
    $region38: #{transformer_forward.1} parent=1 // pred_check
      _
    $region39: #{transformer_forward.1} parent=1 // pred_check_branch
      %36 = sbr.rel (0) target = $region41
    $region40: #{transformer_forward.1} parent=1 // pred_region
      _
    $region41: #{transformer_forward.1} parent=1 // pred_fallthru
      _
    // Predicated region
    $region42: #{transformer_forward.1} parent=1 // pred_check
      _
    $region43: #{transformer_forward.1} parent=1 // pred_check_branch
      %38 = sbr.rel (0) target = $region45
    $region44: #{transformer_forward.1} parent=1 // pred_region
      _
    $region45: #{transformer_forward.1} parent=1 // pred_fallthru
      _
    %v40 = vld [vmem:[%s0] sm:$0xff]
    %v41 = vld [vmem:[%s0 + $0x8] sm:$0xff]
    %v42 = vld [vmem:[%s1] sm:$0x1]
    %v43 = vld [vmem:[%s1 + $0x1] sm:$0x1]
    %v44 = vld [vmem:[%s1 + $0x2] sm:$0x1]
    %v45 = vld [vmem:[%s1 + $0x3] sm:$0x1]
    %v46 = vld [vmem:[%s1 + $0x4] sm:$0x1]
    %v47 = vld [vmem:[%s1 + $0x5] sm:$0x1]
    %v48 = vld [vmem:[%s2] sm:$0x1]
    %vm49 = vcmask 261120
    %v50 = vsel %vm49, %v40, 0.0
    %51 = vadd.xlane.f32.xlu0 %v50
    %v52 = vpop.xlane.xlu0 %51
    %v53 = vsel %vm49, %v41, 0.0
    %54 = vadd.xlane.f32.xlu0 %v53
    %v55 = vpop.xlane.xlu0 %54
    %v56 = vrcp.pop 32.0
    %v57 = vmul.f32 32.0, %v56
    %v58 = vsub.f32 1.0, %v57
    %v59 = vmul.f32 %v56, %v58
    %v60 = vadd.f32 %v56, %v59
    %vm61 = vweird.f32 %v56
    %v62 = vsel %vm61, %v56, %v60
    %v63 = vmul.f32 %v52, %v62
    %v64 = vmul.f32 %v55, %v62
    %v65 = vsub.f32 %v40, %v63
    %v66 = vsub.f32 %v41, %v64
    %v67 = vmul.f32 %v65, %v65
    %v68 = vmul.f32 %v66, %v66
    %v69 = vsel %vm49, %v67, 0.0
    %70 = vadd.xlane.f32.xlu0 %v69
    %v71 = vpop.xlane.xlu0 %70
    %v72 = vsel %vm49, %v68, 0.0
    %73 = vadd.xlane.f32.xlu0 %v72
    %v74 = vpop.xlane.xlu0 %73
    %v75 = vmul.f32 %v71, %v62
    %v76 = vmul.f32 %v74, %v62
    %v77 = vadd.f32 %v75, 1e-05
    %v78 = vadd.f32 %v76, 1e-05
    %v79 = vrsqrt.pop %v77
    %v80 = vmul.f32 %v79, %v77
    %v81 = vmul.f32 %v80, %v79
    %v82 = vmul.f32 0.5, %v81
    %v83 = vsub.f32 1.5, %v82
    %v84 = vmul.f32 %v79, %v83
    %vm85 = vweird.f32 %v77
    %vm86 = vweird.f32 %v79
    %vm87 = vmor %vm85, %vm86
    %v88 = vsel %vm87, %v79, %v84
    %v89 = vrsqrt.pop %v78
    %v90 = vmul.f32 %v89, %v78
    %v91 = vmul.f32 %v90, %v89
    %v92 = vmul.f32 0.5, %v91
    %v93 = vsub.f32 1.5, %v92
    %v94 = vmul.f32 %v89, %v93
    %vm95 = vweird.f32 %v78
    %vm96 = vweird.f32 %v89
    %vm97 = vmor %vm95, %vm96
    %v98 = vsel %vm97, %v89, %v94
    %v99 = vmul.f32 %v65, %v88
    %v100 = vmul.f32 %v66, %v98
    %v101 = vperm.slane %v42, 0
    %v102 = vmul.f32 %v99, %v101
    %v103 = vmul.f32 %v100, %v101
    %v104 = vperm.slane %v43, 0
    %v105 = vadd.f32 %v102, %v104
    %v106 = vadd.f32 %v103, %v104
    %v107 = vpack.c.bf16 %v106, %v105
    %v108 = vld [vmem:[%s3] sm:$0xff]
    %v109 = vld [vmem:[%s3 + $0x8] sm:$0xff]
    %v110 = vld [vmem:[%s3 + $0x10] sm:$0xff]
    %v111 = vld [vmem:[%s3 + $0x18] sm:$0xff]
    %v116 = vunpack.c.l.b16 %v108
    %v117 = vunpack.c.h.b16 %v108
    %v118 = vunpack.c.l.b16 %v109
    %v119 = vunpack.c.h.b16 %v109
    %v120 = vunpack.c.l.b16 %v110
    %v121 = vunpack.c.h.b16 %v110
    %v122 = vunpack.c.l.b16 %v111
    %v123 = vunpack.c.h.b16 %v111
    %v124 = vpack.c.b16 %v118, %v116
    %v125 = vpack.c.b16 %v119, %v117
    %v126 = vpack.c.b16 %v122, %v120
    %v127 = vpack.c.b16 %v123, %v121
    %v133 = vsel %vm49, %v107, 0
    %135 = vmatpush.bf16.msra.mxu0 0
    %136 = vmatpush.bf16.msra.mxu0 0
    %137 = vmatpush.bf16.msra.mxu0 0
    %138 = vmatpush.bf16.msra.mxu0 0
    %139 = vmatpush.bf16.msra.mxu0 0
    %140 = vmatpush.bf16.msra.mxu0 0
    %141 = vmatpush.bf16.msra.mxu0 %v126
    %142 = vmatpush.bf16.msra.mxu0 %v124
    %143 = vmatmul.bf16.gmra.mxu0 %v133
    %v144 = vpop.f32.mrf.mxu0
    %v145 = vadd.f32 0.0, %v144
    %v146 = vpop.f32.mrf.mxu0
    %v147 = vadd.f32 0.0, %v146
    %148 = vdwg.mxu0
    %149 = vmatpush.bf16.msra.mxu0 0
    %150 = vmatpush.bf16.msra.mxu0 0
    %151 = vmatpush.bf16.msra.mxu0 0
    %152 = vmatpush.bf16.msra.mxu0 0
    %153 = vmatpush.bf16.msra.mxu0 0
    %154 = vmatpush.bf16.msra.mxu0 0
    %155 = vmatpush.bf16.msra.mxu0 %v127
    %156 = vmatpush.bf16.msra.mxu0 %v125
    %157 = vmatmul.bf16.gmra.mxu0 %v133
    %v158 = vpop.f32.mrf.mxu0
    %v159 = vadd.f32 0.0, %v158
    %v160 = vpop.f32.mrf.mxu0
    %v161 = vadd.f32 0.0, %v160
    %162 = vdwg.mxu0
    %v163 = vpack.c.bf16 %v145, %v145
    %v164 = vpack.c.bf16 %v147, %v147
    %v166 = vunpack.c.l.b16 %v163
    %v167 = vpack.c.b16 %v166, %v166
    %168 = vrot.lane.b32.xlu0 %v167, 64
    %v169 = vpop.permute.xlu0 %168
    %vm170 = vcmask 130048
    %v172 = vsel %vm170, %v163, 0
    %v175 = vsel %vm170, %v169, 0
    %177 = vmatpush.bf16.xpose.msra.mxu0 0
    %178 = vmatpush.bf16.xpose.msra.mxu0 0
    %179 = vmatpush.bf16.xpose.msra.mxu0 0
    %180 = vmatpush.bf16.xpose.msra.mxu0 0
    %181 = vmatpush.bf16.xpose.msra.mxu0 0
    %182 = vmatpush.bf16.xpose.msra.mxu0 0
    %183 = vmatpush.bf16.xpose.msra.mxu0 0
    %184 = vmatpush.bf16.xpose.msra.mxu0 %v175
    %185 = vmatmul.bf16.gmra.mxu0 %v172
    %v186 = vpop.f32.mrf.mxu0
    %v187 = vadd.f32 0.0, %v186
    %v188 = vpop.f32.mrf.mxu0
    %189 = vdwg.mxu0
    %v191 = vunpack.c.l.b16 %v164
    %v192 = vpack.c.b16 %v191, %v191
    %193 = vrot.lane.b32.xlu0 %v192, 64
    %v194 = vpop.permute.xlu0 %193
    %v196 = vsel %vm170, %v164, 0
    %v199 = vsel %vm170, %v194, 0
    %201 = vmatpush.bf16.xpose.msra.mxu0 0
    %202 = vmatpush.bf16.xpose.msra.mxu0 0
    %203 = vmatpush.bf16.xpose.msra.mxu0 0
    %204 = vmatpush.bf16.xpose.msra.mxu0 0
    %205 = vmatpush.bf16.xpose.msra.mxu0 0
    %206 = vmatpush.bf16.xpose.msra.mxu0 0
    %207 = vmatpush.bf16.xpose.msra.mxu0 0
    %208 = vmatpush.bf16.xpose.msra.mxu0 %v199
    %209 = vmatmul.bf16.gmra.mxu0 %v196
    %v210 = vpop.f32.mrf.mxu0
    %v211 = vadd.f32 0.0, %v210
    %v212 = vpop.f32.mrf.mxu0
    %213 = vdwg.mxu0
    %v214 = vmul.f32 %v187, 0.25
    %v215 = vmul.f32 %v211, 0.25
    %vm216 = vcmask 64512
    %v217 = vsel %vm216, %v214, -inf
    %218 = vmax.xlane.f32.xlu0 %v217
    %v219 = vpop.xlane.xlu0 %218
    %v220 = vsel %vm216, %v215, -inf
    %221 = vmax.xlane.f32.xlu0 %v220
    %v222 = vpop.xlane.xlu0 %221
    %v223 = vsub.f32 %v214, %v219
    %v224 = vsub.f32 %v215, %v222
    %v225 = vmul.f32 %v223, 1.442695
    %v226 = vpow.pop %v225
    %v227 = vmul.f32 %v224, 1.442695
    %v228 = vpow.pop %v227
    %v229 = vsel %vm216, %v226, 0.0
    %230 = vadd.xlane.f32.xlu0 %v229
    %v231 = vpop.xlane.xlu0 %230
    %v232 = vsel %vm216, %v228, 0.0
    %233 = vadd.xlane.f32.xlu0 %v232
    %v234 = vpop.xlane.xlu0 %233
    %v235 = vrcp.pop %v231
    %v236 = vrcp.pop %v234
    %v237 = vmul.f32 %v226, %v235
    %v238 = vmul.f32 %v228, %v236
    %v239 = vpack.c.bf16 %v237, %v237
    %v240 = vpack.c.bf16 %v238, %v238
    %v241 = vpack.c.bf16 %v159, %v159
    %v242 = vpack.c.bf16 %v161, %v161
    %v244 = vsel %vm216, %v239, 0
    %vm246 = vcmask 1043456
    %v248 = vsel %vm246, %v241, 0
    %250 = vmatpush.bf16.msra.mxu0 0
    %251 = vmatpush.bf16.msra.mxu0 0
    %252 = vmatpush.bf16.msra.mxu0 0
    %253 = vmatpush.bf16.msra.mxu0 0
    %254 = vmatpush.bf16.msra.mxu0 0
    %255 = vmatpush.bf16.msra.mxu0 0
    %256 = vmatpush.bf16.msra.mxu0 0
    %257 = vmatpush.bf16.msra.mxu0 %v248
    %258 = vmatmul.bf16.gmra.mxu0 %v244
    %v259 = vpop.f32.mrf.mxu0
    %v260 = vadd.f32 0.0, %v259
    %v261 = vpop.f32.mrf.mxu0
    %262 = vdwg.mxu0
    %v264 = vsel %vm216, %v240, 0
    %v267 = vsel %vm246, %v242, 0
    %269 = vmatpush.bf16.msra.mxu0 0
    %270 = vmatpush.bf16.msra.mxu0 0
    %271 = vmatpush.bf16.msra.mxu0 0
    %272 = vmatpush.bf16.msra.mxu0 0
    %273 = vmatpush.bf16.msra.mxu0 0
    %274 = vmatpush.bf16.msra.mxu0 0
    %275 = vmatpush.bf16.msra.mxu0 0
    %276 = vmatpush.bf16.msra.mxu0 %v267
    %277 = vmatmul.bf16.gmra.mxu0 %v264
    %v278 = vpop.f32.mrf.mxu0
    %v279 = vadd.f32 0.0, %v278
    %v280 = vpop.f32.mrf.mxu0
    %281 = vdwg.mxu0
    %282 = vrot.lane.b32.xlu0 %v167, 112
    %v283 = vpop.permute.xlu0 %282
    %284 = vrot.lane.b32.xlu0 %v167, 48
    %v285 = vpop.permute.xlu0 %284
    %v287 = vsel %vm170, %v283, 0
    %v290 = vsel %vm170, %v285, 0
    %292 = vmatpush.bf16.xpose.msra.mxu0 0
    %293 = vmatpush.bf16.xpose.msra.mxu0 0
    %294 = vmatpush.bf16.xpose.msra.mxu0 0
    %295 = vmatpush.bf16.xpose.msra.mxu0 0
    %296 = vmatpush.bf16.xpose.msra.mxu0 0
    %297 = vmatpush.bf16.xpose.msra.mxu0 0
    %298 = vmatpush.bf16.xpose.msra.mxu0 0
    %299 = vmatpush.bf16.xpose.msra.mxu0 %v290
    %300 = vmatmul.bf16.gmra.mxu0 %v287
    %v301 = vpop.f32.mrf.mxu0
    %v302 = vadd.f32 0.0, %v301
    %v303 = vpop.f32.mrf.mxu0
    %304 = vdwg.mxu0
    %305 = vrot.lane.b32.xlu0 %v192, 112
    %v306 = vpop.permute.xlu0 %305
    %307 = vrot.lane.b32.xlu0 %v192, 48
    %v308 = vpop.permute.xlu0 %307
    %v310 = vsel %vm170, %v306, 0
    %v313 = vsel %vm170, %v308, 0
    %315 = vmatpush.bf16.xpose.msra.mxu0 0
    %316 = vmatpush.bf16.xpose.msra.mxu0 0
    %317 = vmatpush.bf16.xpose.msra.mxu0 0
    %318 = vmatpush.bf16.xpose.msra.mxu0 0
    %319 = vmatpush.bf16.xpose.msra.mxu0 0
    %320 = vmatpush.bf16.xpose.msra.mxu0 0
    %321 = vmatpush.bf16.xpose.msra.mxu0 0
    %322 = vmatpush.bf16.xpose.msra.mxu0 %v313
    %323 = vmatmul.bf16.gmra.mxu0 %v310
    %v324 = vpop.f32.mrf.mxu0
    %v325 = vadd.f32 0.0, %v324
    %v326 = vpop.f32.mrf.mxu0
    %327 = vdwg.mxu0
    %v328 = vmul.f32 %v302, 0.25
    %v329 = vmul.f32 %v325, 0.25
    %v330 = vsel %vm216, %v328, -inf
    %331 = vmax.xlane.f32.xlu0 %v330
    %v332 = vpop.xlane.xlu0 %331
    %v333 = vsel %vm216, %v329, -inf
    %334 = vmax.xlane.f32.xlu0 %v333
    %v335 = vpop.xlane.xlu0 %334
    %v336 = vsub.f32 %v328, %v332
    %v337 = vsub.f32 %v329, %v335
    %v338 = vmul.f32 %v336, 1.442695
    %v339 = vpow.pop %v338
    %v340 = vmul.f32 %v337, 1.442695
    %v341 = vpow.pop %v340
    %v342 = vsel %vm216, %v339, 0.0
    %343 = vadd.xlane.f32.xlu0 %v342
    %v344 = vpop.xlane.xlu0 %343
    %v345 = vsel %vm216, %v341, 0.0
    %346 = vadd.xlane.f32.xlu0 %v345
    %v347 = vpop.xlane.xlu0 %346
    %v348 = vrcp.pop %v344
    %v349 = vrcp.pop %v347
    %v350 = vmul.f32 %v339, %v348
    %v351 = vmul.f32 %v341, %v349
    %v352 = vpack.c.bf16 %v350, %v350
    %v353 = vpack.c.bf16 %v351, %v351
    %v355 = vunpack.c.l.b16 %v241
    %v356 = vpack.c.b16 %v355, %v355
    %357 = vrot.lane.b32.xlu0 %v356, 112
    %v358 = vpop.permute.xlu0 %357
    %v360 = vsel %vm216, %v352, 0
    %v363 = vsel %vm246, %v358, 0
    %365 = vmatpush.bf16.msra.mxu0 0
    %366 = vmatpush.bf16.msra.mxu0 0
    %367 = vmatpush.bf16.msra.mxu0 0
    %368 = vmatpush.bf16.msra.mxu0 0
    %369 = vmatpush.bf16.msra.mxu0 0
    %370 = vmatpush.bf16.msra.mxu0 0
    %371 = vmatpush.bf16.msra.mxu0 0
    %372 = vmatpush.bf16.msra.mxu0 %v363
    %373 = vmatmul.bf16.gmra.mxu0 %v360
    %v374 = vpop.f32.mrf.mxu0
    %v375 = vadd.f32 0.0, %v374
    %v376 = vpop.f32.mrf.mxu0
    %377 = vdwg.mxu0
    %v379 = vunpack.c.l.b16 %v242
    %v380 = vpack.c.b16 %v379, %v379
    %381 = vrot.lane.b32.xlu0 %v380, 112
    %v382 = vpop.permute.xlu0 %381
    %v384 = vsel %vm216, %v353, 0
    %v387 = vsel %vm246, %v382, 0
    %389 = vmatpush.bf16.msra.mxu0 0
    %390 = vmatpush.bf16.msra.mxu0 0
    %391 = vmatpush.bf16.msra.mxu0 0
    %392 = vmatpush.bf16.msra.mxu0 0
    %393 = vmatpush.bf16.msra.mxu0 0
    %394 = vmatpush.bf16.msra.mxu0 0
    %395 = vmatpush.bf16.msra.mxu0 0
    %396 = vmatpush.bf16.msra.mxu0 %v387
    %397 = vmatmul.bf16.gmra.mxu0 %v384
    %v398 = vpop.f32.mrf.mxu0
    %v399 = vadd.f32 0.0, %v398
    %v400 = vpop.f32.mrf.mxu0
    %401 = vdwg.mxu0
    %402 = vrot.lane.b32.xlu0 %v167, 96
    %v403 = vpop.permute.xlu0 %402
    %404 = vrot.lane.b32.xlu0 %v167, 32
    %v405 = vpop.permute.xlu0 %404
    %v407 = vsel %vm170, %v403, 0
    %v410 = vsel %vm170, %v405, 0
    %412 = vmatpush.bf16.xpose.msra.mxu0 0
    %413 = vmatpush.bf16.xpose.msra.mxu0 0
    %414 = vmatpush.bf16.xpose.msra.mxu0 0
    %415 = vmatpush.bf16.xpose.msra.mxu0 0
    %416 = vmatpush.bf16.xpose.msra.mxu0 0
    %417 = vmatpush.bf16.xpose.msra.mxu0 0
    %418 = vmatpush.bf16.xpose.msra.mxu0 0
    %419 = vmatpush.bf16.xpose.msra.mxu0 %v410
    %420 = vmatmul.bf16.gmra.mxu0 %v407
    %v421 = vpop.f32.mrf.mxu0
    %v422 = vadd.f32 0.0, %v421
    %v423 = vpop.f32.mrf.mxu0
    %424 = vdwg.mxu0
    %425 = vrot.lane.b32.xlu0 %v192, 96
    %v426 = vpop.permute.xlu0 %425
    %427 = vrot.lane.b32.xlu0 %v192, 32
    %v428 = vpop.permute.xlu0 %427
    %v430 = vsel %vm170, %v426, 0
    %v433 = vsel %vm170, %v428, 0
    %435 = vmatpush.bf16.xpose.msra.mxu0 0
    %436 = vmatpush.bf16.xpose.msra.mxu0 0
    %437 = vmatpush.bf16.xpose.msra.mxu0 0
    %438 = vmatpush.bf16.xpose.msra.mxu0 0
    %439 = vmatpush.bf16.xpose.msra.mxu0 0
    %440 = vmatpush.bf16.xpose.msra.mxu0 0
    %441 = vmatpush.bf16.xpose.msra.mxu0 0
    %442 = vmatpush.bf16.xpose.msra.mxu0 %v433
    %443 = vmatmul.bf16.gmra.mxu0 %v430
    %v444 = vpop.f32.mrf.mxu0
    %v445 = vadd.f32 0.0, %v444
    %v446 = vpop.f32.mrf.mxu0
    %447 = vdwg.mxu0
    %v448 = vmul.f32 %v422, 0.25
    %v449 = vmul.f32 %v445, 0.25
    %v450 = vsel %vm216, %v448, -inf
    %451 = vmax.xlane.f32.xlu0 %v450
    %v452 = vpop.xlane.xlu0 %451
    %v453 = vsel %vm216, %v449, -inf
    %454 = vmax.xlane.f32.xlu0 %v453
    %v455 = vpop.xlane.xlu0 %454
    %v456 = vsub.f32 %v448, %v452
    %v457 = vsub.f32 %v449, %v455
    %v458 = vmul.f32 %v456, 1.442695
    %v459 = vpow.pop %v458
    %v460 = vmul.f32 %v457, 1.442695
    %v461 = vpow.pop %v460
    %v462 = vsel %vm216, %v459, 0.0
    %463 = vadd.xlane.f32.xlu0 %v462
    %v464 = vpop.xlane.xlu0 %463
    %v465 = vsel %vm216, %v461, 0.0
    %466 = vadd.xlane.f32.xlu0 %v465
    %v467 = vpop.xlane.xlu0 %466
    %v468 = vrcp.pop %v464
    %v469 = vrcp.pop %v467
    %v470 = vmul.f32 %v459, %v468
    %v471 = vmul.f32 %v461, %v469
    %v472 = vpack.c.bf16 %v470, %v470
    %v473 = vpack.c.bf16 %v471, %v471
    %474 = vrot.lane.b32.xlu0 %v356, 96
    %v475 = vpop.permute.xlu0 %474
    %v477 = vsel %vm216, %v472, 0
    %v480 = vsel %vm246, %v475, 0
    %482 = vmatpush.bf16.msra.mxu0 0
    %483 = vmatpush.bf16.msra.mxu0 0
    %484 = vmatpush.bf16.msra.mxu0 0
    %485 = vmatpush.bf16.msra.mxu0 0
    %486 = vmatpush.bf16.msra.mxu0 0
    %487 = vmatpush.bf16.msra.mxu0 0
    %488 = vmatpush.bf16.msra.mxu0 0
    %489 = vmatpush.bf16.msra.mxu0 %v480
    %490 = vmatmul.bf16.gmra.mxu0 %v477
    %v491 = vpop.f32.mrf.mxu0
    %v492 = vadd.f32 0.0, %v491
    %v493 = vpop.f32.mrf.mxu0
    %494 = vdwg.mxu0
    %495 = vrot.lane.b32.xlu0 %v380, 96
    %v496 = vpop.permute.xlu0 %495
    %v498 = vsel %vm216, %v473, 0
    %v501 = vsel %vm246, %v496, 0
    %503 = vmatpush.bf16.msra.mxu0 0
    %504 = vmatpush.bf16.msra.mxu0 0
    %505 = vmatpush.bf16.msra.mxu0 0
    %506 = vmatpush.bf16.msra.mxu0 0
    %507 = vmatpush.bf16.msra.mxu0 0
    %508 = vmatpush.bf16.msra.mxu0 0
    %509 = vmatpush.bf16.msra.mxu0 0
    %510 = vmatpush.bf16.msra.mxu0 %v501
    %511 = vmatmul.bf16.gmra.mxu0 %v498
    %v512 = vpop.f32.mrf.mxu0
    %v513 = vadd.f32 0.0, %v512
    %v514 = vpop.f32.mrf.mxu0
    %515 = vdwg.mxu0
    %516 = vrot.lane.b32.xlu0 %v167, 80
    %v517 = vpop.permute.xlu0 %516
    %518 = vrot.lane.b32.xlu0 %v167, 16
    %v519 = vpop.permute.xlu0 %518
    %v521 = vsel %vm170, %v517, 0
    %v524 = vsel %vm170, %v519, 0
    %526 = vmatpush.bf16.xpose.msra.mxu0 0
    %527 = vmatpush.bf16.xpose.msra.mxu0 0
    %528 = vmatpush.bf16.xpose.msra.mxu0 0
    %529 = vmatpush.bf16.xpose.msra.mxu0 0
    %530 = vmatpush.bf16.xpose.msra.mxu0 0
    %531 = vmatpush.bf16.xpose.msra.mxu0 0
    %532 = vmatpush.bf16.xpose.msra.mxu0 0
    %533 = vmatpush.bf16.xpose.msra.mxu0 %v524
    %534 = vmatmul.bf16.gmra.mxu0 %v521
    %v535 = vpop.f32.mrf.mxu0
    %v536 = vadd.f32 0.0, %v535
    %v537 = vpop.f32.mrf.mxu0
    %538 = vdwg.mxu0
    %539 = vrot.lane.b32.xlu0 %v192, 80
    %v540 = vpop.permute.xlu0 %539
    %541 = vrot.lane.b32.xlu0 %v192, 16
    %v542 = vpop.permute.xlu0 %541
    %v544 = vsel %vm170, %v540, 0
    %v547 = vsel %vm170, %v542, 0
    %549 = vmatpush.bf16.xpose.msra.mxu0 0
    %550 = vmatpush.bf16.xpose.msra.mxu0 0
    %551 = vmatpush.bf16.xpose.msra.mxu0 0
    %552 = vmatpush.bf16.xpose.msra.mxu0 0
    %553 = vmatpush.bf16.xpose.msra.mxu0 0
    %554 = vmatpush.bf16.xpose.msra.mxu0 0
    %555 = vmatpush.bf16.xpose.msra.mxu0 0
    %556 = vmatpush.bf16.xpose.msra.mxu0 %v547
    %557 = vmatmul.bf16.gmra.mxu0 %v544
    %v558 = vpop.f32.mrf.mxu0
    %v559 = vadd.f32 0.0, %v558
    %v560 = vpop.f32.mrf.mxu0
    %561 = vdwg.mxu0
    %v562 = vmul.f32 %v536, 0.25
    %v563 = vmul.f32 %v559, 0.25
    %v564 = vsel %vm216, %v562, -inf
    %565 = vmax.xlane.f32.xlu0 %v564
    %v566 = vpop.xlane.xlu0 %565
    %v567 = vsel %vm216, %v563, -inf
    %568 = vmax.xlane.f32.xlu0 %v567
    %v569 = vpop.xlane.xlu0 %568
    %v570 = vsub.f32 %v562, %v566
    %v571 = vsub.f32 %v563, %v569
    %v572 = vmul.f32 %v570, 1.442695
    %v573 = vpow.pop %v572
    %v574 = vmul.f32 %v571, 1.442695
    %v575 = vpow.pop %v574
    %v576 = vsel %vm216, %v573, 0.0
    %577 = vadd.xlane.f32.xlu0 %v576
    %v578 = vpop.xlane.xlu0 %577
    %v579 = vsel %vm216, %v575, 0.0
    %580 = vadd.xlane.f32.xlu0 %v579
    %v581 = vpop.xlane.xlu0 %580
    %v582 = vrcp.pop %v578
    %v583 = vrcp.pop %v581
    %v584 = vmul.f32 %v573, %v582
    %v585 = vmul.f32 %v575, %v583
    %v586 = vpack.c.bf16 %v584, %v584
    %v587 = vpack.c.bf16 %v585, %v585
    %588 = vrot.lane.b32.xlu0 %v356, 80
    %v589 = vpop.permute.xlu0 %588
    %v591 = vsel %vm216, %v586, 0
    %v594 = vsel %vm246, %v589, 0
    %596 = vmatpush.bf16.msra.mxu0 0
    %597 = vmatpush.bf16.msra.mxu0 0
    %598 = vmatpush.bf16.msra.mxu0 0
    %599 = vmatpush.bf16.msra.mxu0 0
    %600 = vmatpush.bf16.msra.mxu0 0
    %601 = vmatpush.bf16.msra.mxu0 0
    %602 = vmatpush.bf16.msra.mxu0 0
    %603 = vmatpush.bf16.msra.mxu0 %v594
    %604 = vmatmul.bf16.gmra.mxu0 %v591
    %v605 = vpop.f32.mrf.mxu0
    %v606 = vadd.f32 0.0, %v605
    %v607 = vpop.f32.mrf.mxu0
    %608 = vdwg.mxu0
    %609 = vrot.lane.b32.xlu0 %v380, 80
    %v610 = vpop.permute.xlu0 %609
    %v612 = vsel %vm216, %v587, 0
    %v615 = vsel %vm246, %v610, 0
    %617 = vmatpush.bf16.msra.mxu0 0
    %618 = vmatpush.bf16.msra.mxu0 0
    %619 = vmatpush.bf16.msra.mxu0 0
    %620 = vmatpush.bf16.msra.mxu0 0
    %621 = vmatpush.bf16.msra.mxu0 0
    %622 = vmatpush.bf16.msra.mxu0 0
    %623 = vmatpush.bf16.msra.mxu0 0
    %624 = vmatpush.bf16.msra.mxu0 %v615
    %625 = vmatmul.bf16.gmra.mxu0 %v612
    %v626 = vpop.f32.mrf.mxu0
    %v627 = vadd.f32 0.0, %v626
    %v628 = vpop.f32.mrf.mxu0
    %629 = vdwg.mxu0
    %632 = vrot.lane.b32.xlu0 %v375, 16
    %v633 = vpop.permute.xlu0 %632
    %634 = vrot.lane.b32.xlu0 %v399, 16
    %v635 = vpop.permute.xlu0 %634
    %640 = vrot.lane.b32.xlu0 %v492, 32
    %v641 = vpop.permute.xlu0 %640
    %642 = vrot.lane.b32.xlu0 %v513, 32
    %v643 = vpop.permute.xlu0 %642
    %648 = vrot.lane.b32.xlu0 %v606, 48
    %v649 = vpop.permute.xlu0 %648
    %650 = vrot.lane.b32.xlu0 %v627, 48
    %v651 = vpop.permute.xlu0 %650
    %v654 = vsel %vm170, %v260, %v633
    %v655 = vsel %vm170, %v279, %v635
    %v656 = vsel %vm49, %v654, %v641
    %v657 = vsel %vm49, %v655, %v643
    %vm658 = vcmask 392192
    %v659 = vsel %vm658, %v656, %v649
    %v660 = vsel %vm658, %v657, %v651
    %v661 = vpack.c.bf16 %v660, %v659
    %v662 = vld [vmem:[%s4] sm:$0xf]
    %v663 = vld [vmem:[%s4 + $0x4] sm:$0xf]
    %v664 = vld [vmem:[%s4 + $0x8] sm:$0xf]
    %v665 = vld [vmem:[%s4 + $0xc] sm:$0xf]
    %v666 = vld [vmem:[%s4 + $0x10] sm:$0xf]
    %v667 = vld [vmem:[%s4 + $0x14] sm:$0xf]
    %v668 = vld [vmem:[%s4 + $0x18] sm:$0xf]
    %v669 = vld [vmem:[%s4 + $0x1c] sm:$0xf]
    %v670 = vperm.slane %v44, 0
    %v679 = vunpack.c.l.b16 %v662
    %v680 = vunpack.c.l.b16 %v663
    %v681 = vunpack.c.l.b16 %v664
    %v682 = vunpack.c.l.b16 %v665
    %v683 = vunpack.c.l.b16 %v666
    %v684 = vunpack.c.l.b16 %v667
    %v685 = vunpack.c.l.b16 %v668
    %v686 = vunpack.c.l.b16 %v669
    %v687 = vpack.c.b16 %v680, %v679
    %v688 = vpack.c.b16 %v682, %v681
    %v689 = vpack.c.b16 %v684, %v683
    %v690 = vpack.c.b16 %v686, %v685
    %vm695 = vcmask 523264
    %v697 = vsel %vm695, %v661, 0
    %699 = vmatpush.bf16.msra.mxu0 0
    %700 = vmatpush.bf16.msra.mxu0 0
    %701 = vmatpush.bf16.msra.mxu0 0
    %702 = vmatpush.bf16.msra.mxu0 0
    %703 = vmatpush.bf16.msra.mxu0 %v690
    %704 = vmatpush.bf16.msra.mxu0 %v689
    %705 = vmatpush.bf16.msra.mxu0 %v688
    %706 = vmatpush.bf16.msra.mxu0 %v687
    %707 = vmatmul.bf16.gmra.mxu0 %v697
    %v708 = vpop.f32.mrf.mxu0
    %v709 = vadd.f32 %v670, %v708
    %v710 = vpop.f32.mrf.mxu0
    %v711 = vadd.f32 %v670, %v710
    %712 = vdwg.mxu0
    %v713 = vadd.f32 %v709, %v40
    %v714 = vadd.f32 %v711, %v41
    %v715 = vsel %vm49, %v713, 0.0
    %716 = vadd.xlane.f32.xlu0 %v715
    %v717 = vpop.xlane.xlu0 %716
    %v718 = vsel %vm49, %v714, 0.0
    %719 = vadd.xlane.f32.xlu0 %v718
    %v720 = vpop.xlane.xlu0 %719
    %v721 = vmul.f32 %v717, %v62
    %v722 = vmul.f32 %v720, %v62
    %v723 = vsub.f32 %v713, %v721
    %v724 = vsub.f32 %v714, %v722
    %v725 = vmul.f32 %v723, %v723
    %v726 = vmul.f32 %v724, %v724
    %v727 = vsel %vm49, %v725, 0.0
    %728 = vadd.xlane.f32.xlu0 %v727
    %v729 = vpop.xlane.xlu0 %728
    %v730 = vsel %vm49, %v726, 0.0
    %731 = vadd.xlane.f32.xlu0 %v730
    %v732 = vpop.xlane.xlu0 %731
    %v733 = vmul.f32 %v729, %v62
    %v734 = vmul.f32 %v732, %v62
    %v735 = vadd.f32 %v733, 1e-05
    %v736 = vadd.f32 %v734, 1e-05
    %v737 = vrsqrt.pop %v735
    %v738 = vmul.f32 %v737, %v735
    %v739 = vmul.f32 %v738, %v737
    %v740 = vmul.f32 0.5, %v739
    %v741 = vsub.f32 1.5, %v740
    %v742 = vmul.f32 %v737, %v741
    %vm743 = vweird.f32 %v735
    %vm744 = vweird.f32 %v737
    %vm745 = vmor %vm743, %vm744
    %v746 = vsel %vm745, %v737, %v742
    %v747 = vrsqrt.pop %v736
    %v748 = vmul.f32 %v747, %v736
    %v749 = vmul.f32 %v748, %v747
    %v750 = vmul.f32 0.5, %v749
    %v751 = vsub.f32 1.5, %v750
    %v752 = vmul.f32 %v747, %v751
    %vm753 = vweird.f32 %v736
    %vm754 = vweird.f32 %v747
    %vm755 = vmor %vm753, %vm754
    %v756 = vsel %vm755, %v747, %v752
    %v757 = vmul.f32 %v723, %v746
    %v758 = vmul.f32 %v724, %v756
    %v759 = vperm.slane %v45, 0
    %v760 = vmul.f32 %v757, %v759
    %v761 = vmul.f32 %v758, %v759
    %v762 = vperm.slane %v46, 0
    %v763 = vadd.f32 %v760, %v762
    %v764 = vadd.f32 %v761, %v762
    %v765 = vpack.c.bf16 %v764, %v763
    %v766 = vld [vmem:[%s5] sm:$0xf]
    %v767 = vld [vmem:[%s5 + $0x4] sm:$0xf]
    %v768 = vld [vmem:[%s5 + $0x8] sm:$0xf]
    %v769 = vld [vmem:[%s5 + $0xc] sm:$0xf]
    %v770 = vperm.slane %v48, 0
    %v775 = vunpack.c.l.b16 %v766
    %v776 = vunpack.c.l.b16 %v767
    %v777 = vunpack.c.l.b16 %v768
    %v778 = vunpack.c.l.b16 %v769
    %v779 = vpack.c.b16 %v776, %v775
    %v780 = vpack.c.b16 %v778, %v777
    %v784 = vsel %vm49, %v765, 0
    %786 = vmatpush.bf16.msra.mxu0 0
    %787 = vmatpush.bf16.msra.mxu0 0
    %788 = vmatpush.bf16.msra.mxu0 0
    %789 = vmatpush.bf16.msra.mxu0 0
    %790 = vmatpush.bf16.msra.mxu0 0
    %791 = vmatpush.bf16.msra.mxu0 0
    %792 = vmatpush.bf16.msra.mxu0 %v780
    %793 = vmatpush.bf16.msra.mxu0 %v779
    %794 = vmatmul.bf16.gmra.mxu0 %v784
    %v795 = vpop.f32.mrf.mxu0
    %v796 = vadd.f32 %v770, %v795
    %v797 = vpop.f32.mrf.mxu0
    %v798 = vadd.f32 %v770, %v797
    %799 = vdwg.mxu0
    %v800 = vmul.f32 %v796, 0.5
    %v801 = vmul.f32 %v798, 0.5
    %v802 = vmul.f32 %v796, 0.70710677
    %v803 = vmul.f32 %v798, 0.70710677
    %v804 = vand.u32 2147483647, %v802
    %v805 = vand.u32 2147483647, %v803
    %v806 = vmul.f32 %v804, 0.3275911
    %v807 = vmul.f32 %v805, 0.3275911
    %v808 = vadd.f32 %v806, 1.0
    %v809 = vadd.f32 %v807, 1.0
    %v810 = vrcp.pop %v808
    %v811 = vmul.f32 %v808, %v810
    %v812 = vsub.f32 1.0, %v811
    %v813 = vmul.f32 %v810, %v812
    %v814 = vadd.f32 %v810, %v813
    %vm815 = vweird.f32 %v808
    %vm816 = vweird.f32 %v810
    %vm817 = vmor %vm815, %vm816
    %v818 = vsel %vm817, %v810, %v814
    %v819 = vand.u32 2147483647, %v808
    %vm820 = vcmp.eq.f32.partialorder %v819, 8.507059e+37
    %v821 = vand.u32 %v808, 2147483648
    %v822 = vor.u32 1.1754944e-38, %v821
    %v823 = vsel %vm820, %v822, %v818
    %v824 = vmul.f32 1.0, %v823
    %v825 = vrcp.pop %v809
    %v826 = vmul.f32 %v809, %v825
    %v827 = vsub.f32 1.0, %v826
    %v828 = vmul.f32 %v825, %v827
    %v829 = vadd.f32 %v825, %v828
    %vm830 = vweird.f32 %v809
    %vm831 = vweird.f32 %v825
    %vm832 = vmor %vm830, %vm831
    %v833 = vsel %vm832, %v825, %v829
    %v834 = vand.u32 2147483647, %v809
    %vm835 = vcmp.eq.f32.partialorder %v834, 8.507059e+37
    %v836 = vand.u32 %v809, 2147483648
    %v837 = vor.u32 1.1754944e-38, %v836
    %v838 = vsel %vm835, %v837, %v833
    %v839 = vmul.f32 1.0, %v838
    %v840 = vmul.f32 %v824, 1.0614054
    %v841 = vmul.f32 %v839, 1.0614054
    %v842 = vadd.f32 %v840, -1.4531521
    %v843 = vadd.f32 %v841, -1.4531521
    %v844 = vmul.f32 %v824, %v842
    %v845 = vmul.f32 %v839, %v843
    %v846 = vadd.f32 %v844, 1.4214138
    %v847 = vadd.f32 %v845, 1.4214138
    %v848 = vmul.f32 %v824, %v846
    %v849 = vmul.f32 %v839, %v847
    %v850 = vadd.f32 %v848, -0.28449672
    %v851 = vadd.f32 %v849, -0.28449672
    %v852 = vmul.f32 %v824, %v850
    %v853 = vmul.f32 %v839, %v851
    %v854 = vadd.f32 %v852, 0.2548296
    %v855 = vadd.f32 %v853, 0.2548296
    %v856 = vmul.f32 %v824, %v854
    %v857 = vmul.f32 %v839, %v855
    %v858 = vsub.f32 0.0, %v804
    %v859 = vsub.f32 0.0, %v805
    %v860 = vmul.f32 %v858, %v804
    %v861 = vmul.f32 %v859, %v805
    %v862 = vmul.f32 %v860, 1.442695
    %v863 = vpow.pop %v862
    %v864 = vmul.f32 %v861, 1.442695
    %v865 = vpow.pop %v864
    %v866 = vmul.f32 %v856, %v863
    %v867 = vmul.f32 %v857, %v865
    %v868 = vsub.f32 1.0, %v866
    %v869 = vsub.f32 1.0, %v867
    %vm870 = vcmp.ge.f32.partialorder %v802, 0.0
    %vm871 = vcmp.ge.f32.partialorder %v803, 0.0
    %v872 = vsub.f32 0.0, %v868
    %v873 = vsub.f32 0.0, %v869
    %v874 = vsel %vm870, %v868, %v872
    %v875 = vsel %vm871, %v869, %v873
    %v876 = vadd.f32 %v874, 1.0
    %v877 = vadd.f32 %v875, 1.0
    %v878 = vmul.f32 %v800, %v876
    %v879 = vmul.f32 %v801, %v877
    %v880 = vpack.c.bf16 %v879, %v878
    %v881 = vld [vmem:[%s6] sm:$0xf]
    %v882 = vld [vmem:[%s6 + $0x4] sm:$0xf]
    %v883 = vld [vmem:[%s6 + $0x8] sm:$0xf]
    %v884 = vld [vmem:[%s6 + $0xc] sm:$0xf]
    %v885 = vld [vmem:[%s6 + $0x10] sm:$0xf]
    %v886 = vld [vmem:[%s6 + $0x14] sm:$0xf]
    %v887 = vld [vmem:[%s6 + $0x18] sm:$0xf]
    %v888 = vld [vmem:[%s6 + $0x1c] sm:$0xf]
    %v889 = vperm.slane %v47, 0
    %v898 = vunpack.c.l.b16 %v881
    %v899 = vunpack.c.l.b16 %v882
    %v900 = vunpack.c.l.b16 %v883
    %v901 = vunpack.c.l.b16 %v884
    %v902 = vunpack.c.l.b16 %v885
    %v903 = vunpack.c.l.b16 %v886
    %v904 = vunpack.c.l.b16 %v887
    %v905 = vunpack.c.l.b16 %v888
    %v906 = vpack.c.b16 %v899, %v898
    %v907 = vpack.c.b16 %v901, %v900
    %v908 = vpack.c.b16 %v903, %v902
    %v909 = vpack.c.b16 %v905, %v904
    %v915 = vsel %vm695, %v880, 0
    %917 = vmatpush.bf16.msra.mxu0 0
    %918 = vmatpush.bf16.msra.mxu0 0
    %919 = vmatpush.bf16.msra.mxu0 0
    %920 = vmatpush.bf16.msra.mxu0 0
    %921 = vmatpush.bf16.msra.mxu0 %v909
    %922 = vmatpush.bf16.msra.mxu0 %v908
    %923 = vmatpush.bf16.msra.mxu0 %v907
    %924 = vmatpush.bf16.msra.mxu0 %v906
    %925 = vmatmul.bf16.gmra.mxu0 %v915
    %v926 = vpop.f32.mrf.mxu0
    %v927 = vadd.f32 %v889, %v926
    %v928 = vpop.f32.mrf.mxu0
    %v929 = vadd.f32 %v889, %v928
    %930 = vdwg.mxu0
    %v931 = vadd.f32 %v927, %v713
    %v932 = vadd.f32 %v929, %v714
    %v933 = vld [vmem:[%s1 + $0x6] sm:$0x1]
    %v934 = vld [vmem:[%s1 + $0x7] sm:$0x1]
    %v935 = vld [vmem:[%s1 + $0x8] sm:$0x1]
    %v936 = vld [vmem:[%s1 + $0x9] sm:$0x1]
    %v937 = vld [vmem:[%s1 + $0xa] sm:$0x1]
    %v938 = vld [vmem:[%s1 + $0xb] sm:$0x1]
    %v939 = vld [vmem:[%s2 + $0x1] sm:$0x1]
    %v940 = vsel %vm49, %v931, 0.0
    %941 = vadd.xlane.f32.xlu0 %v940
    %v942 = vpop.xlane.xlu0 %941
    %v943 = vsel %vm49, %v932, 0.0
    %944 = vadd.xlane.f32.xlu0 %v943
    %v945 = vpop.xlane.xlu0 %944
    %v946 = vmul.f32 %v942, %v62
    %v947 = vmul.f32 %v945, %v62
    %v948 = vsub.f32 %v931, %v946
    %v949 = vsub.f32 %v932, %v947
    %v950 = vmul.f32 %v948, %v948
    %v951 = vmul.f32 %v949, %v949
    %v952 = vsel %vm49, %v950, 0.0
    %953 = vadd.xlane.f32.xlu0 %v952
    %v954 = vpop.xlane.xlu0 %953
    %v955 = vsel %vm49, %v951, 0.0
    %956 = vadd.xlane.f32.xlu0 %v955
    %v957 = vpop.xlane.xlu0 %956
    %v958 = vmul.f32 %v954, %v62
    %v959 = vmul.f32 %v957, %v62
    %v960 = vadd.f32 %v958, 1e-05
    %v961 = vadd.f32 %v959, 1e-05
    %v962 = vrsqrt.pop %v960
    %v963 = vmul.f32 %v962, %v960
    %v964 = vmul.f32 %v963, %v962
    %v965 = vmul.f32 0.5, %v964
    %v966 = vsub.f32 1.5, %v965
    %v967 = vmul.f32 %v962, %v966
    %vm968 = vweird.f32 %v960
    %vm969 = vweird.f32 %v962
    %vm970 = vmor %vm968, %vm969
    %v971 = vsel %vm970, %v962, %v967
    %v972 = vrsqrt.pop %v961
    %v973 = vmul.f32 %v972, %v961
    %v974 = vmul.f32 %v973, %v972
    %v975 = vmul.f32 0.5, %v974
    %v976 = vsub.f32 1.5, %v975
    %v977 = vmul.f32 %v972, %v976
    %vm978 = vweird.f32 %v961
    %vm979 = vweird.f32 %v972
    %vm980 = vmor %vm978, %vm979
    %v981 = vsel %vm980, %v972, %v977
    %v982 = vmul.f32 %v948, %v971
    %v983 = vmul.f32 %v949, %v981
    %v984 = vperm.slane %v933, 0
    %v985 = vmul.f32 %v982, %v984
    %v986 = vmul.f32 %v983, %v984
    %v987 = vperm.slane %v934, 0
    %v988 = vadd.f32 %v985, %v987
    %v989 = vadd.f32 %v986, %v987
    %v990 = vpack.c.bf16 %v989, %v988
    %v991 = vld [vmem:[%s7] sm:$0xf]
    %v992 = vld [vmem:[%s7 + $0x4] sm:$0xf]
    %v993 = vld [vmem:[%s7 + $0x8] sm:$0xf]
    %v994 = vld [vmem:[%s7 + $0xc] sm:$0xf]
    %v999 = vunpack.c.l.b16 %v991
    %v1000 = vunpack.c.l.b16 %v992
    %v1001 = vunpack.c.l.b16 %v993
    %v1002 = vunpack.c.l.b16 %v994
    %v1003 = vpack.c.b16 %v1000, %v999
    %v1004 = vpack.c.b16 %v1002, %v1001
    %v1008 = vsel %vm49, %v990, 0
    %1010 = vmatpush.bf16.msra.mxu0 0
    %1011 = vmatpush.bf16.msra.mxu0 0
    %1012 = vmatpush.bf16.msra.mxu0 0
    %1013 = vmatpush.bf16.msra.mxu0 0
    %1014 = vmatpush.bf16.msra.mxu0 0
    %1015 = vmatpush.bf16.msra.mxu0 0
    %1016 = vmatpush.bf16.msra.mxu0 %v1004
    %1017 = vmatpush.bf16.msra.mxu0 %v1003
    %1018 = vmatmul.bf16.gmra.mxu0 %v1008
    %v1019 = vpop.f32.mrf.mxu0
    %v1020 = vadd.f32 0.0, %v1019
    %v1021 = vpop.f32.mrf.mxu0
    %v1022 = vadd.f32 0.0, %v1021
    %1023 = vdwg.mxu0
    %v1024 = vpack.c.bf16 %v1020, %v1020
    %v1025 = vpack.c.bf16 %v1022, %v1022
    %v1027 = vunpack.c.l.b16 %v1024
    %v1028 = vpack.c.b16 %v1027, %v1027
    %1029 = vrot.lane.b32.xlu0 %v1028, 96
    %v1030 = vpop.permute.xlu0 %1029
    %v1032 = vsel %vm170, %v1024, 0
    %v1035 = vsel %vm170, %v1030, 0
    %1037 = vmatpush.bf16.xpose.msra.mxu0 0
    %1038 = vmatpush.bf16.xpose.msra.mxu0 0
    %1039 = vmatpush.bf16.xpose.msra.mxu0 0
    %1040 = vmatpush.bf16.xpose.msra.mxu0 0
    %1041 = vmatpush.bf16.xpose.msra.mxu0 0
    %1042 = vmatpush.bf16.xpose.msra.mxu0 0
    %1043 = vmatpush.bf16.xpose.msra.mxu0 0
    %1044 = vmatpush.bf16.xpose.msra.mxu0 %v1035
    %1045 = vmatmul.bf16.gmra.mxu0 %v1032
    %v1046 = vpop.f32.mrf.mxu0
    %v1047 = vadd.f32 0.0, %v1046
    %v1048 = vpop.f32.mrf.mxu0
    %1049 = vdwg.mxu0
    %v1051 = vunpack.c.l.b16 %v1025
    %v1052 = vpack.c.b16 %v1051, %v1051
    %1053 = vrot.lane.b32.xlu0 %v1052, 96
    %v1054 = vpop.permute.xlu0 %1053
    %v1056 = vsel %vm170, %v1025, 0
    %v1059 = vsel %vm170, %v1054, 0
    %1061 = vmatpush.bf16.xpose.msra.mxu0 0
    %1062 = vmatpush.bf16.xpose.msra.mxu0 0
    %1063 = vmatpush.bf16.xpose.msra.mxu0 0
    %1064 = vmatpush.bf16.xpose.msra.mxu0 0
    %1065 = vmatpush.bf16.xpose.msra.mxu0 0
    %1066 = vmatpush.bf16.xpose.msra.mxu0 0
    %1067 = vmatpush.bf16.xpose.msra.mxu0 0
    %1068 = vmatpush.bf16.xpose.msra.mxu0 %v1059
    %1069 = vmatmul.bf16.gmra.mxu0 %v1056
    %v1070 = vpop.f32.mrf.mxu0
    %v1071 = vadd.f32 0.0, %v1070
    %v1072 = vpop.f32.mrf.mxu0
    %1073 = vdwg.mxu0
    %v1074 = vmul.f32 %v1047, 0.25
    %v1075 = vmul.f32 %v1071, 0.25
    %v1076 = vsel %vm216, %v1074, -inf
    %1077 = vmax.xlane.f32.xlu0 %v1076
    %v1078 = vpop.xlane.xlu0 %1077
    %v1079 = vsel %vm216, %v1075, -inf
    %1080 = vmax.xlane.f32.xlu0 %v1079
    %v1081 = vpop.xlane.xlu0 %1080
    %v1082 = vsub.f32 %v1074, %v1078
    %v1083 = vsub.f32 %v1075, %v1081
    %v1084 = vmul.f32 %v1082, 1.442695
    %v1085 = vpow.pop %v1084
    %v1086 = vmul.f32 %v1083, 1.442695
    %v1087 = vpow.pop %v1086
    %v1088 = vsel %vm216, %v1085, 0.0
    %1089 = vadd.xlane.f32.xlu0 %v1088
    %v1090 = vpop.xlane.xlu0 %1089
    %v1091 = vsel %vm216, %v1087, 0.0
    %1092 = vadd.xlane.f32.xlu0 %v1091
    %v1093 = vpop.xlane.xlu0 %1092
    %v1094 = vrcp.pop %v1090
    %v1095 = vrcp.pop %v1093
    %v1096 = vmul.f32 %v1085, %v1094
    %v1097 = vmul.f32 %v1087, %v1095
    %v1098 = vpack.c.bf16 %v1096, %v1096
    %v1099 = vpack.c.bf16 %v1097, %v1097
    %1100 = vrot.lane.b32.xlu0 %v1028, 64
    %v1101 = vpop.permute.xlu0 %1100
    %v1103 = vsel %vm216, %v1098, 0
    %v1106 = vsel %vm246, %v1101, 0
    %1108 = vmatpush.bf16.msra.mxu0 0
    %1109 = vmatpush.bf16.msra.mxu0 0
    %1110 = vmatpush.bf16.msra.mxu0 0
    %1111 = vmatpush.bf16.msra.mxu0 0
    %1112 = vmatpush.bf16.msra.mxu0 0
    %1113 = vmatpush.bf16.msra.mxu0 0
    %1114 = vmatpush.bf16.msra.mxu0 0
    %1115 = vmatpush.bf16.msra.mxu0 %v1106
    %1116 = vmatmul.bf16.gmra.mxu0 %v1103
    %v1117 = vpop.f32.mrf.mxu0
    %v1118 = vadd.f32 0.0, %v1117
    %v1119 = vpop.f32.mrf.mxu0
    %1120 = vdwg.mxu0
    %1121 = vrot.lane.b32.xlu0 %v1052, 64
    %v1122 = vpop.permute.xlu0 %1121
    %v1124 = vsel %vm216, %v1099, 0
    %v1127 = vsel %vm246, %v1122, 0
    %1129 = vmatpush.bf16.msra.mxu0 0
    %1130 = vmatpush.bf16.msra.mxu0 0
    %1131 = vmatpush.bf16.msra.mxu0 0
    %1132 = vmatpush.bf16.msra.mxu0 0
    %1133 = vmatpush.bf16.msra.mxu0 0
    %1134 = vmatpush.bf16.msra.mxu0 0
    %1135 = vmatpush.bf16.msra.mxu0 0
    %1136 = vmatpush.bf16.msra.mxu0 %v1127
    %1137 = vmatmul.bf16.gmra.mxu0 %v1124
    %v1138 = vpop.f32.mrf.mxu0
    %v1139 = vadd.f32 0.0, %v1138
    %v1140 = vpop.f32.mrf.mxu0
    %1141 = vdwg.mxu0
    %1142 = vrot.lane.b32.xlu0 %v1028, 112
    %v1143 = vpop.permute.xlu0 %1142
    %1144 = vrot.lane.b32.xlu0 %v1028, 80
    %v1145 = vpop.permute.xlu0 %1144
    %v1147 = vsel %vm170, %v1143, 0
    %v1150 = vsel %vm170, %v1145, 0
    %1152 = vmatpush.bf16.xpose.msra.mxu0 0
    %1153 = vmatpush.bf16.xpose.msra.mxu0 0
    %1154 = vmatpush.bf16.xpose.msra.mxu0 0
    %1155 = vmatpush.bf16.xpose.msra.mxu0 0
    %1156 = vmatpush.bf16.xpose.msra.mxu0 0
    %1157 = vmatpush.bf16.xpose.msra.mxu0 0
    %1158 = vmatpush.bf16.xpose.msra.mxu0 0
    %1159 = vmatpush.bf16.xpose.msra.mxu0 %v1150
    %1160 = vmatmul.bf16.gmra.mxu0 %v1147
    %v1161 = vpop.f32.mrf.mxu0
    %v1162 = vadd.f32 0.0, %v1161
    %v1163 = vpop.f32.mrf.mxu0
    %1164 = vdwg.mxu0
    %1165 = vrot.lane.b32.xlu0 %v1052, 112
    %v1166 = vpop.permute.xlu0 %1165
    %1167 = vrot.lane.b32.xlu0 %v1052, 80
    %v1168 = vpop.permute.xlu0 %1167
    %v1170 = vsel %vm170, %v1166, 0
    %v1173 = vsel %vm170, %v1168, 0
    %1175 = vmatpush.bf16.xpose.msra.mxu0 0
    %1176 = vmatpush.bf16.xpose.msra.mxu0 0
    %1177 = vmatpush.bf16.xpose.msra.mxu0 0
    %1178 = vmatpush.bf16.xpose.msra.mxu0 0
    %1179 = vmatpush.bf16.xpose.msra.mxu0 0
    %1180 = vmatpush.bf16.xpose.msra.mxu0 0
    %1181 = vmatpush.bf16.xpose.msra.mxu0 0
    %1182 = vmatpush.bf16.xpose.msra.mxu0 %v1173
    %1183 = vmatmul.bf16.gmra.mxu0 %v1170
    %v1184 = vpop.f32.mrf.mxu0
    %v1185 = vadd.f32 0.0, %v1184
    %v1186 = vpop.f32.mrf.mxu0
    %1187 = vdwg.mxu0
    %v1188 = vmul.f32 %v1162, 0.25
    %v1189 = vmul.f32 %v1185, 0.25
    %v1190 = vsel %vm216, %v1188, -inf
    %1191 = vmax.xlane.f32.xlu0 %v1190
    %v1192 = vpop.xlane.xlu0 %1191
    %v1193 = vsel %vm216, %v1189, -inf
    %1194 = vmax.xlane.f32.xlu0 %v1193
    %v1195 = vpop.xlane.xlu0 %1194
    %v1196 = vsub.f32 %v1188, %v1192
    %v1197 = vsub.f32 %v1189, %v1195
    %v1198 = vmul.f32 %v1196, 1.442695
    %v1199 = vpow.pop %v1198
    %v1200 = vmul.f32 %v1197, 1.442695
    %v1201 = vpow.pop %v1200
    %v1202 = vsel %vm216, %v1199, 0.0
    %1203 = vadd.xlane.f32.xlu0 %v1202
    %v1204 = vpop.xlane.xlu0 %1203
    %v1205 = vsel %vm216, %v1201, 0.0
    %1206 = vadd.xlane.f32.xlu0 %v1205
    %v1207 = vpop.xlane.xlu0 %1206
    %v1208 = vrcp.pop %v1204
    %v1209 = vrcp.pop %v1207
    %v1210 = vmul.f32 %v1199, %v1208
    %v1211 = vmul.f32 %v1201, %v1209
    %v1212 = vpack.c.bf16 %v1210, %v1210
    %v1213 = vpack.c.bf16 %v1211, %v1211
    %1214 = vrot.lane.b32.xlu0 %v1028, 48
    %v1215 = vpop.permute.xlu0 %1214
    %v1217 = vsel %vm216, %v1212, 0
    %v1220 = vsel %vm246, %v1215, 0
    %1222 = vmatpush.bf16.msra.mxu0 0
    %1223 = vmatpush.bf16.msra.mxu0 0
    %1224 = vmatpush.bf16.msra.mxu0 0
    %1225 = vmatpush.bf16.msra.mxu0 0
    %1226 = vmatpush.bf16.msra.mxu0 0
    %1227 = vmatpush.bf16.msra.mxu0 0
    %1228 = vmatpush.bf16.msra.mxu0 0
    %1229 = vmatpush.bf16.msra.mxu0 %v1220
    %1230 = vmatmul.bf16.gmra.mxu0 %v1217
    %v1231 = vpop.f32.mrf.mxu0
    %v1232 = vadd.f32 0.0, %v1231
    %v1233 = vpop.f32.mrf.mxu0
    %1234 = vdwg.mxu0
    %1235 = vrot.lane.b32.xlu0 %v1052, 48
    %v1236 = vpop.permute.xlu0 %1235
    %v1238 = vsel %vm216, %v1213, 0
    %v1241 = vsel %vm246, %v1236, 0
    %1243 = vmatpush.bf16.msra.mxu0 0
    %1244 = vmatpush.bf16.msra.mxu0 0
    %1245 = vmatpush.bf16.msra.mxu0 0
    %1246 = vmatpush.bf16.msra.mxu0 0
    %1247 = vmatpush.bf16.msra.mxu0 0
    %1248 = vmatpush.bf16.msra.mxu0 0
    %1249 = vmatpush.bf16.msra.mxu0 0
    %1250 = vmatpush.bf16.msra.mxu0 %v1241
    %1251 = vmatmul.bf16.gmra.mxu0 %v1238
    %v1252 = vpop.f32.mrf.mxu0
    %v1253 = vadd.f32 0.0, %v1252
    %v1254 = vpop.f32.mrf.mxu0
    %1255 = vdwg.mxu0
    %1258 = vrot.lane.b32.xlu0 %v1232, 16
    %v1259 = vpop.permute.xlu0 %1258
    %1260 = vrot.lane.b32.xlu0 %v1253, 16
    %v1261 = vpop.permute.xlu0 %1260
    %v1264 = vsel %vm170, %v1118, %v1259
    %v1265 = vsel %vm170, %v1139, %v1261
    %v1266 = vpack.c.bf16 %v1265, %v1264
    %v1267 = vld [vmem:[%s8] sm:$0xf]
    %v1268 = vld [vmem:[%s8 + $0x4] sm:$0xf]
    %v1269 = vld [vmem:[%s8 + $0x8] sm:$0xf]
    %v1270 = vld [vmem:[%s8 + $0xc] sm:$0xf]
    %v1271 = vperm.slane %v935, 0
    %v1276 = vunpack.c.l.b16 %v1267
    %v1277 = vunpack.c.l.b16 %v1268
    %v1278 = vunpack.c.l.b16 %v1269
    %v1279 = vunpack.c.l.b16 %v1270
    %v1280 = vpack.c.b16 %v1277, %v1276
    %v1281 = vpack.c.b16 %v1279, %v1278
    %v1285 = vsel %vm49, %v1266, 0
    %1287 = vmatpush.bf16.msra.mxu0 0
    %1288 = vmatpush.bf16.msra.mxu0 0
    %1289 = vmatpush.bf16.msra.mxu0 0
    %1290 = vmatpush.bf16.msra.mxu0 0
    %1291 = vmatpush.bf16.msra.mxu0 0
    %1292 = vmatpush.bf16.msra.mxu0 0
    %1293 = vmatpush.bf16.msra.mxu0 %v1281
    %1294 = vmatpush.bf16.msra.mxu0 %v1280
    %1295 = vmatmul.bf16.gmra.mxu0 %v1285
    %v1296 = vpop.f32.mrf.mxu0
    %v1297 = vadd.f32 %v1271, %v1296
    %v1298 = vpop.f32.mrf.mxu0
    %v1299 = vadd.f32 %v1271, %v1298
    %1300 = vdwg.mxu0
    %v1301 = vadd.f32 %v1297, %v931
    %v1302 = vadd.f32 %v1299, %v932
    %v1303 = vsel %vm49, %v1301, 0.0
    %1304 = vadd.xlane.f32.xlu0 %v1303
    %v1305 = vpop.xlane.xlu0 %1304
    %v1306 = vsel %vm49, %v1302, 0.0
    %1307 = vadd.xlane.f32.xlu0 %v1306
    %v1308 = vpop.xlane.xlu0 %1307
    %v1309 = vmul.f32 %v1305, %v62
    %v1310 = vmul.f32 %v1308, %v62
    %v1311 = vsub.f32 %v1301, %v1309
    %v1312 = vsub.f32 %v1302, %v1310
    %v1313 = vmul.f32 %v1311, %v1311
    %v1314 = vmul.f32 %v1312, %v1312
    %v1315 = vsel %vm49, %v1313, 0.0
    %1316 = vadd.xlane.f32.xlu0 %v1315
    %v1317 = vpop.xlane.xlu0 %1316
    %v1318 = vsel %vm49, %v1314, 0.0
    %1319 = vadd.xlane.f32.xlu0 %v1318
    %v1320 = vpop.xlane.xlu0 %1319
    %v1321 = vmul.f32 %v1317, %v62
    %v1322 = vmul.f32 %v1320, %v62
    %v1323 = vadd.f32 %v1321, 1e-05
    %v1324 = vadd.f32 %v1322, 1e-05
    %v1325 = vrsqrt.pop %v1323
    %v1326 = vmul.f32 %v1325, %v1323
    %v1327 = vmul.f32 %v1326, %v1325
    %v1328 = vmul.f32 0.5, %v1327
    %v1329 = vsub.f32 1.5, %v1328
    %v1330 = vmul.f32 %v1325, %v1329
    %vm1331 = vweird.f32 %v1323
    %vm1332 = vweird.f32 %v1325
    %vm1333 = vmor %vm1331, %vm1332
    %v1334 = vsel %vm1333, %v1325, %v1330
    %v1335 = vrsqrt.pop %v1324
    %v1336 = vmul.f32 %v1335, %v1324
    %v1337 = vmul.f32 %v1336, %v1335
    %v1338 = vmul.f32 0.5, %v1337
    %v1339 = vsub.f32 1.5, %v1338
    %v1340 = vmul.f32 %v1335, %v1339
    %vm1341 = vweird.f32 %v1324
    %vm1342 = vweird.f32 %v1335
    %vm1343 = vmor %vm1341, %vm1342
    %v1344 = vsel %vm1343, %v1335, %v1340
    %v1345 = vmul.f32 %v1311, %v1334
    %v1346 = vmul.f32 %v1312, %v1344
    %v1347 = vperm.slane %v936, 0
    %v1348 = vmul.f32 %v1345, %v1347
    %v1349 = vmul.f32 %v1346, %v1347
    %v1350 = vperm.slane %v937, 0
    %v1351 = vadd.f32 %v1348, %v1350
    %v1352 = vadd.f32 %v1349, %v1350
    %v1353 = vpack.c.bf16 %v1352, %v1351
    %v1354 = vld [vmem:[%s9] sm:$0xf]
    %v1355 = vld [vmem:[%s9 + $0x4] sm:$0xf]
    %v1356 = vld [vmem:[%s9 + $0x8] sm:$0xf]
    %v1357 = vld [vmem:[%s9 + $0xc] sm:$0xf]
    %v1358 = vperm.slane %v939, 0
    %v1363 = vunpack.c.l.b16 %v1354
    %v1364 = vunpack.c.l.b16 %v1355
    %v1365 = vunpack.c.l.b16 %v1356
    %v1366 = vunpack.c.l.b16 %v1357
    %v1367 = vpack.c.b16 %v1364, %v1363
    %v1368 = vpack.c.b16 %v1366, %v1365
    %v1372 = vsel %vm49, %v1353, 0
    %1374 = vmatpush.bf16.msra.mxu0 0
    %1375 = vmatpush.bf16.msra.mxu0 0
    %1376 = vmatpush.bf16.msra.mxu0 0
    %1377 = vmatpush.bf16.msra.mxu0 0
    %1378 = vmatpush.bf16.msra.mxu0 0
    %1379 = vmatpush.bf16.msra.mxu0 0
    %1380 = vmatpush.bf16.msra.mxu0 %v1368
    %1381 = vmatpush.bf16.msra.mxu0 %v1367
    %1382 = vmatmul.bf16.gmra.mxu0 %v1372
    %v1383 = vpop.f32.mrf.mxu0
    %v1384 = vadd.f32 %v1358, %v1383
    %v1385 = vpop.f32.mrf.mxu0
    %v1386 = vadd.f32 %v1358, %v1385
    %1387 = vdwg.mxu0
    %v1388 = vmul.f32 %v1384, 0.5
    %v1389 = vmul.f32 %v1386, 0.5
    %v1390 = vmul.f32 %v1384, 0.70710677
    %v1391 = vmul.f32 %v1386, 0.70710677
    %v1392 = vand.u32 2147483647, %v1390
    %v1393 = vand.u32 2147483647, %v1391
    %v1394 = vmul.f32 %v1392, 0.3275911
    %v1395 = vmul.f32 %v1393, 0.3275911
    %v1396 = vadd.f32 %v1394, 1.0
    %v1397 = vadd.f32 %v1395, 1.0
    %v1398 = vrcp.pop %v1396
    %v1399 = vmul.f32 %v1396, %v1398
    %v1400 = vsub.f32 1.0, %v1399
    %v1401 = vmul.f32 %v1398, %v1400
    %v1402 = vadd.f32 %v1398, %v1401
    %vm1403 = vweird.f32 %v1396
    %vm1404 = vweird.f32 %v1398
    %vm1405 = vmor %vm1403, %vm1404
    %v1406 = vsel %vm1405, %v1398, %v1402
    %v1407 = vand.u32 2147483647, %v1396
    %vm1408 = vcmp.eq.f32.partialorder %v1407, 8.507059e+37
    %v1409 = vand.u32 %v1396, 2147483648
    %v1410 = vor.u32 1.1754944e-38, %v1409
    %v1411 = vsel %vm1408, %v1410, %v1406
    %v1412 = vmul.f32 1.0, %v1411
    %v1413 = vrcp.pop %v1397
    %v1414 = vmul.f32 %v1397, %v1413
    %v1415 = vsub.f32 1.0, %v1414
    %v1416 = vmul.f32 %v1413, %v1415
    %v1417 = vadd.f32 %v1413, %v1416
    %vm1418 = vweird.f32 %v1397
    %vm1419 = vweird.f32 %v1413
    %vm1420 = vmor %vm1418, %vm1419
    %v1421 = vsel %vm1420, %v1413, %v1417
    %v1422 = vand.u32 2147483647, %v1397
    %vm1423 = vcmp.eq.f32.partialorder %v1422, 8.507059e+37
    %v1424 = vand.u32 %v1397, 2147483648
    %v1425 = vor.u32 1.1754944e-38, %v1424
    %v1426 = vsel %vm1423, %v1425, %v1421
    %v1427 = vmul.f32 1.0, %v1426
    %v1428 = vmul.f32 %v1412, 1.0614054
    %v1429 = vmul.f32 %v1427, 1.0614054
    %v1430 = vadd.f32 %v1428, -1.4531521
    %v1431 = vadd.f32 %v1429, -1.4531521
    %v1432 = vmul.f32 %v1412, %v1430
    %v1433 = vmul.f32 %v1427, %v1431
    %v1434 = vadd.f32 %v1432, 1.4214138
    %v1435 = vadd.f32 %v1433, 1.4214138
    %v1436 = vmul.f32 %v1412, %v1434
    %v1437 = vmul.f32 %v1427, %v1435
    %v1438 = vadd.f32 %v1436, -0.28449672
    %v1439 = vadd.f32 %v1437, -0.28449672
    %v1440 = vmul.f32 %v1412, %v1438
    %v1441 = vmul.f32 %v1427, %v1439
    %v1442 = vadd.f32 %v1440, 0.2548296
    %v1443 = vadd.f32 %v1441, 0.2548296
    %v1444 = vmul.f32 %v1412, %v1442
    %v1445 = vmul.f32 %v1427, %v1443
    %v1446 = vsub.f32 0.0, %v1392
    %v1447 = vsub.f32 0.0, %v1393
    %v1448 = vmul.f32 %v1446, %v1392
    %v1449 = vmul.f32 %v1447, %v1393
    %v1450 = vmul.f32 %v1448, 1.442695
    %v1451 = vpow.pop %v1450
    %v1452 = vmul.f32 %v1449, 1.442695
    %v1453 = vpow.pop %v1452
    %v1454 = vmul.f32 %v1444, %v1451
    %v1455 = vmul.f32 %v1445, %v1453
    %v1456 = vsub.f32 1.0, %v1454
    %v1457 = vsub.f32 1.0, %v1455
    %vm1458 = vcmp.ge.f32.partialorder %v1390, 0.0
    %vm1459 = vcmp.ge.f32.partialorder %v1391, 0.0
    %v1460 = vsub.f32 0.0, %v1456
    %v1461 = vsub.f32 0.0, %v1457
    %v1462 = vsel %vm1458, %v1456, %v1460
    %v1463 = vsel %vm1459, %v1457, %v1461
    %v1464 = vadd.f32 %v1462, 1.0
    %v1465 = vadd.f32 %v1463, 1.0
    %v1466 = vmul.f32 %v1388, %v1464
    %v1467 = vmul.f32 %v1389, %v1465
    %v1468 = vpack.c.bf16 %v1467, %v1466
    %v1469 = vld [vmem:[%s10] sm:$0xf]
    %v1470 = vld [vmem:[%s10 + $0x4] sm:$0xf]
    %v1471 = vld [vmem:[%s10 + $0x8] sm:$0xf]
    %v1472 = vld [vmem:[%s10 + $0xc] sm:$0xf]
    %v1473 = vld [vmem:[%s10 + $0x10] sm:$0xf]
    %v1474 = vld [vmem:[%s10 + $0x14] sm:$0xf]
    %v1475 = vld [vmem:[%s10 + $0x18] sm:$0xf]
    %v1476 = vld [vmem:[%s10 + $0x1c] sm:$0xf]
    %v1477 = vperm.slane %v938, 0
    %v1486 = vunpack.c.l.b16 %v1469
    %v1487 = vunpack.c.l.b16 %v1470
    %v1488 = vunpack.c.l.b16 %v1471
    %v1489 = vunpack.c.l.b16 %v1472
    %v1490 = vunpack.c.l.b16 %v1473
    %v1491 = vunpack.c.l.b16 %v1474
    %v1492 = vunpack.c.l.b16 %v1475
    %v1493 = vunpack.c.l.b16 %v1476
    %v1494 = vpack.c.b16 %v1487, %v1486
    %v1495 = vpack.c.b16 %v1489, %v1488
    %v1496 = vpack.c.b16 %v1491, %v1490
    %v1497 = vpack.c.b16 %v1493, %v1492
    %v1503 = vsel %vm695, %v1468, 0
    %1505 = vmatpush.bf16.msra.mxu0 0
    %1506 = vmatpush.bf16.msra.mxu0 0
    %1507 = vmatpush.bf16.msra.mxu0 0
    %1508 = vmatpush.bf16.msra.mxu0 0
    %1509 = vmatpush.bf16.msra.mxu0 %v1497
    %1510 = vmatpush.bf16.msra.mxu0 %v1496
    %1511 = vmatpush.bf16.msra.mxu0 %v1495
    %1512 = vmatpush.bf16.msra.mxu0 %v1494
    %1513 = vmatmul.bf16.gmra.mxu0 %v1503
    %v1514 = vpop.f32.mrf.mxu0
    %v1515 = vadd.f32 %v1477, %v1514
    %v1516 = vpop.f32.mrf.mxu0
    %v1517 = vadd.f32 %v1477, %v1516
    %1518 = vdwg.mxu0
    %v1519 = vadd.f32 %v1515, %v1301
    %v1520 = vadd.f32 %v1517, %v1302
    %1521 = vst.msk [vmem:[#allocation2] sm:$0xff] %vm49, %v1519
    %1522 = vst.msk [vmem:[#allocation2 + $0x8] sm:$0xff] %vm49, %v1520
    // Predicated region
    $region46: #{transformer_forward.1} parent=1 // pred_check
      _
    $region47: #{transformer_forward.1} parent=1 // pred_check_branch
      %1524 = sbr.rel (0) target = $region49
    $region48: #{transformer_forward.1} parent=1 // pred_region
      %1526 = vsyncadd [#allocation3], 0
      %s1527 = sshll.u32 [#allocation2], 4
      %s1528 = int_to_ptr.vmem [resolvable:$true] %s1527
      %s1529 = sshll.u32 %s11, 4
      %s1530 = int_to_ptr.hbm [resolvable:$true] %s1529
      %1535 = dma.vmem_to_hbm [thread:$0]  %s1528, 256, %s1530, [#allocation3], 128, 128, 8
    $region49: #{transformer_forward.1} parent=1 // pred_fallthru
      _
    // Predicated region
    $region50: #{transformer_forward.1} parent=1 // pred_check
      _
    $region51: #{transformer_forward.1} parent=1 // pred_check_branch
      %1537 = sbr.rel (0) target = $region53
    $region52: #{transformer_forward.1} parent=1 // pred_region
      %1539 = dma.done [#allocation3], 256
    $region53: #{transformer_forward.1} parent=1 // pred_fallthru
      _
    %1540 = vsyncpa [#allocation3], 1

</llo_original>
